<compile_context>
chip_gen: v7x
topology: tpu7x:2x2x1
jax: 0.10.0
libtpu: 0.0.40
codegen_flags: <defaults>
</compile_context>

<pallas_src>
import functools

import jax
import jax.numpy as jnp
from jax.experimental import pallas as pl
from jax.experimental.pallas import tpu as pltpu


def _softplus(x):
    # numerically-stable softplus: max/abs/add on the VALU; one exp + one log1p on the EUP.
    return jnp.maximum(x, 0.0) + jnp.log1p(jnp.exp(-jnp.abs(x)))


_ACTIVATIONS = {
    "cos": jnp.cos,
    "softplus": _softplus,
    "tanh": jnp.tanh,
    "relu": lambda x: jnp.maximum(x, 0.0),
}
_TRANSCENDENTALS_PER_ELEM = {"cos": 1, "softplus": 2, "tanh": 1, "relu": 0}


def _round_up(n, m):
    return ((n + m - 1) // m) * m


def _causal_mlp_kernel(x_ref, w1_ref, b1_ref, w2_ref, b2_ref, w3_ref, b3_ref, o_ref, *, act):
    # Block views at grid point (d = output dim, i = batch tile):
    #   x_ref  : [TB, I]     batch tile (I = in_dim * num_lags)
    #   w1_ref : [1, I, H]   (fc1_pos - fc1_neg) columns for dim d
    #   b1_ref : [1, 1, H]
    #   w2_ref : [1, H, H]   LocalLinear fc_2 weight for dim d
    #   b2_ref : [1, 1, H]
    #   w3_ref : [1, 1, H]   LocalLinear fc_out weight for dim d (transposed)
    #   b3_ref : [1, 1, 1]
    #   o_ref  : [1, TB, 1]  output column for dim d
    x = x_ref[...]
    h = jnp.dot(x, w1_ref[0], preferred_element_type=jnp.float32) + b1_ref[0]
    h = act(h)
    h = jnp.dot(h, w2_ref[0], preferred_element_type=jnp.float32) + b2_ref[0]
    h = act(h)
    out = jnp.sum(h * w3_ref[0], axis=-1, keepdims=True) + b3_ref[0]   # [TB, 1]
    o_ref[0] = out.astype(o_ref.dtype)


def causal_mlp_forward(x, params, *, activation="cos", num_lags=1, block_b=128):
    """Fused CausalMLP forward. x: [..., in_dim * num_lags] f32. Returns x.shape."""
    D, h_in, H = params["fc2_w"].shape
    assert h_in == H
    act = _ACTIVATIONS[activation]

    shape_in = x.shape
    x2 = x.reshape(-1, shape_in[-1]).astype(jnp.float32)
    B, I = x2.shape
    assert I == D * num_lags

    # --- fold fc1_pos - fc1_neg and rearrange per output dim (cheap one-time XLA ops) ---
    w1 = params["fc1_pos_w"] - params["fc1_neg_w"]               # [D*H, I] (PyTorch layout)
    b1 = params["fc1_pos_b"] - params["fc1_neg_b"]               # [D*H]
    w1_r = jnp.transpose(w1.reshape(D, H, I), (0, 2, 1))         # [D, I, H]
    b1_r = b1.reshape(D, 1, H)
    w2_r = params["fc2_w"]                                       # [D, H, H]
    b2_r = params["fc2_b"].reshape(D, 1, H)
    w3_r = params["fcout_w"].reshape(D, 1, H)                    # [D, H, 1] -> [D, 1, H]
    b3_r = params["fcout_b"].reshape(D, 1, 1)

    # --- batch tiling (TB multiple of 8 -> f32 sublane aligned) ---
    TB = min(block_b, _round_up(B, 8))
    Bp = _round_up(B, TB)
    if Bp != B:
        x2 = jnp.pad(x2, ((0, Bp - B), (0, 0)))
    nb = Bp // TB

    n_t = _TRANSCENDENTALS_PER_ELEM[activation]
    cost = pl.CostEstimate(
        flops=2 * Bp * D * (I * H + H * H + H),
        transcendentals=2 * n_t * Bp * D * H,
        bytes_accessed=4 * (D * Bp * I + D * (I * H + H * H + 3 * H + 1) + D * Bp),
    )

    # Weight/bias blocks indexed only by the outer (dim) axis -> VMEM-resident across the
    # inner batch sweep; x/out blocks change every inner step and are double-buffered.
    def wspec(shape):
        return pl.BlockSpec(shape, lambda d, i: (d, 0, 0))

    out3 = pl.pallas_call(
        functools.partial(_causal_mlp_kernel, act=act),
        out_shape=jax.ShapeDtypeStruct((D, Bp, 1), x2.dtype),
        grid=(D, nb),
        in_specs=[
            pl.BlockSpec((TB, I), lambda d, i: (i, 0)),   # x batch tile
            wspec((1, I, H)),                             # folded fc1 slice for dim d
            wspec((1, 1, H)),                             # b1
            wspec((1, H, H)),                             # fc_2 weight
            wspec((1, 1, H)),                             # fc_2 bias
            wspec((1, 1, H)),                             # fc_out weight (transposed)
            wspec((1, 1, 1)),                             # fc_out bias
        ],
        out_specs=pl.BlockSpec((1, TB, 1), lambda d, i: (d, i, 0)),
        compiler_params=pltpu.CompilerParams(
            dimension_semantics=("parallel", "parallel"),  # megacore sharding on v7x
            vmem_limit_bytes=32 * 1024 * 1024,             # explicit budget; fits v7x's 64 MiB
        ),
        cost_estimate=cost,
    )(x2, w1_r, b1_r, w2_r, b2_r, w3_r, b3_r)

    y = out3[:, :B, 0].T                                   # [B, D]
    return y.reshape(shape_in)


def init_params(key, in_dim, hid_dim, num_lags=1):
    """PyTorch-layout parameters matching CausalMLP/LocalLinear shapes."""
    D, H, L = in_dim, hid_dim, num_lags
    I = D * L
    ks = jax.random.split(key, 8)

    def u(k, shape, bound):
        return jax.random.uniform(k, shape, jnp.float32, -bound, bound)

    b_fc1 = 1.0 / (I ** 0.5)
    b_loc = (1.0 / H) ** 0.5
    return {
        "fc1_pos_w": u(ks[0], (D * H, I), b_fc1),
        "fc1_pos_b": u(ks[1], (D * H,), b_fc1),
        "fc1_neg_w": u(ks[2], (D * H, I), b_fc1),
        "fc1_neg_b": u(ks[3], (D * H,), b_fc1),
        "fc2_w":     u(ks[4], (D, H, H), b_loc),
        "fc2_b":     u(ks[5], (D, H), b_loc),
        "fcout_w":   u(ks[6], (D, H, 1), b_loc),
        "fcout_b":   u(ks[7], (D, 1), b_loc),
    }


def causal_mlp_reference(x, params, activation="cos"):
    """Pure-JAX mirror of the PyTorch CausalMLP.forward."""
    act = _ACTIVATIONS[activation]
    D, _, H = params["fc2_w"].shape
    shape_in = x.shape
    x2 = x.reshape(-1, shape_in[-1])
    h = (x2 @ params["fc1_pos_w"].T + params["fc1_pos_b"]) \
      - (x2 @ params["fc1_neg_w"].T + params["fc1_neg_b"])
    h = act(h.reshape(-1, D, H))
    h = act(jnp.einsum("bdh,dhk->bdk", h, params["fc2_w"]) + params["fc2_b"][None])
    out = jnp.einsum("bdh,dhk->bdk", h, params["fcout_w"]) + params["fcout_b"][None]
    return out[..., 0].reshape(shape_in)


if __name__ == "__main__":
    key = jax.random.PRNGKey(0)
    k_x, k_p = jax.random.split(key)

    # Small, module-consistent shapes: hid_dim=128 is the CausalMLP default.
    B, in_dim, hid_dim, num_lags = 64, 8, 128, 1
    x = jax.random.normal(k_x, (B, in_dim * num_lags), jnp.float32)
    params = init_params(k_p, in_dim, hid_dim, num_lags)

    for act_name in ("cos", "softplus"):            # 'cos' is the module default
        out = causal_mlp_forward(x, params, activation=act_name,
                                 num_lags=num_lags, block_b=128)
        out = jax.block_until_ready(out)
        ref = causal_mlp_reference(x, params, activation=act_name)
        assert out.shape == x.shape
        err = float(jnp.max(jnp.abs(out - ref)))
        assert jnp.allclose(out, ref, atol=1e-4, rtol=1e-4), (act_name, err)

    print("KERNEL_OK")
</pallas_src>

<mosaic_0001>
module attributes {stable_mosaic.version = 11 : i64} {
  func.func @_causal_mlp_kernel(%arg0: i32, %arg1: i32, %arg2: memref<64x8xf32, #tpu.memory_space<vmem>>, %arg3: memref<1x8x128xf32, #tpu.memory_space<vmem>>, %arg4: memref<1x1x128xf32, #tpu.memory_space<vmem>>, %arg5: memref<1x128x128xf32, #tpu.memory_space<vmem>>, %arg6: memref<1x1x128xf32, #tpu.memory_space<vmem>>, %arg7: memref<1x1x128xf32, #tpu.memory_space<vmem>>, %arg8: memref<1x1x1xf32, #tpu.memory_space<vmem>>, %arg9: memref<1x64x1xf32, #tpu.memory_space<vmem>>) attributes {dimension_semantics = [#tpu.dimension_semantics<parallel>, #tpu.dimension_semantics<parallel>], iteration_bounds = array<i64: 8, 1>, scalar_prefetch = 0 : i64, scratch_operands = 0 : i64, tpu.core_type = #tpu.core_type<tc>, window_params = [{transform_indices = @transform_0, window_bounds = array<i64: 64, 8>}, {transform_indices = @transform_1, window_bounds = array<i64: 1, 8, 128>}, {transform_indices = @transform_2, window_bounds = array<i64: 1, 1, 128>}, {transform_indices = @transform_3, window_bounds = array<i64: 1, 128, 128>}, {transform_indices = @transform_4, window_bounds = array<i64: 1, 1, 128>}, {transform_indices = @transform_5, window_bounds = array<i64: 1, 1, 128>}, {transform_indices = @transform_6, window_bounds = array<i64: 1, 1, 1>}, {transform_indices = @transform_7, window_bounds = array<i64: 1, 64, 1>}]} {
    %c0 = arith.constant 0 : index
    %c0_0 = arith.constant 0 : index
    %0 = vector.load %arg2[%c0, %c0_0] : memref<64x8xf32, #tpu.memory_space<vmem>>, vector<64x8xf32>
    %c0_1 = arith.constant 0 : index
    %c0_2 = arith.constant 0 : index
    %c0_3 = arith.constant 0 : index
    %1 = vector.load %arg3[%c0_1, %c0_2, %c0_3] : memref<1x8x128xf32, #tpu.memory_space<vmem>>, vector<1x8x128xf32>
    %2 = vector.shape_cast %1 : vector<1x8x128xf32> to vector<8x128xf32>
    %cst = arith.constant dense<0.000000e+00> : vector<64x128xf32>
    %3 = tpu.matmul %0, %2, %cst {dimension_numbers = #tpu.dot_dimension_numbers<[1], [0], [0], [1], [0, 0, 1, 1], [], []>} : vector<64x8xf32>, vector<8x128xf32>, vector<64x128xf32> -> vector<64x128xf32>
    %c0_4 = arith.constant 0 : index
    %c0_5 = arith.constant 0 : index
    %c0_6 = arith.constant 0 : index
    %4 = vector.load %arg4[%c0_4, %c0_5, %c0_6] : memref<1x1x128xf32, #tpu.memory_space<vmem>>, vector<1x1x128xf32>
    %5 = vector.shape_cast %4 : vector<1x1x128xf32> to vector<1x128xf32>
    %6 = vector.broadcast %5 : vector<1x128xf32> to vector<64x128xf32>
    %7 = arith.addf %3, %6 : vector<64x128xf32>
    %8 = math.cos %7 : vector<64x128xf32>
    %c0_7 = arith.constant 0 : index
    %c0_8 = arith.constant 0 : index
    %c0_9 = arith.constant 0 : index
    %9 = vector.load %arg5[%c0_7, %c0_8, %c0_9] : memref<1x128x128xf32, #tpu.memory_space<vmem>>, vector<1x128x128xf32>
    %10 = vector.shape_cast %9 : vector<1x128x128xf32> to vector<128x128xf32>
    %cst_10 = arith.constant dense<0.000000e+00> : vector<64x128xf32>
    %11 = tpu.matmul %8, %10, %cst_10 {dimension_numbers = #tpu.dot_dimension_numbers<[1], [0], [0], [1], [0, 0, 1, 1], [], []>} : vector<64x128xf32>, vector<128x128xf32>, vector<64x128xf32> -> vector<64x128xf32>
    %c0_11 = arith.constant 0 : index
    %c0_12 = arith.constant 0 : index
    %c0_13 = arith.constant 0 : index
    %12 = vector.load %arg6[%c0_11, %c0_12, %c0_13] : memref<1x1x128xf32, #tpu.memory_space<vmem>>, vector<1x1x128xf32>
    %13 = vector.shape_cast %12 : vector<1x1x128xf32> to vector<1x128xf32>
    %14 = vector.broadcast %13 : vector<1x128xf32> to vector<64x128xf32>
    %15 = arith.addf %11, %14 : vector<64x128xf32>
    %16 = math.cos %15 : vector<64x128xf32>
    %c0_14 = arith.constant 0 : index
    %c0_15 = arith.constant 0 : index
    %c0_16 = arith.constant 0 : index
    %17 = vector.load %arg7[%c0_14, %c0_15, %c0_16] : memref<1x1x128xf32, #tpu.memory_space<vmem>>, vector<1x1x128xf32>
    %18 = vector.shape_cast %17 : vector<1x1x128xf32> to vector<1x128xf32>
    %19 = vector.broadcast %18 : vector<1x128xf32> to vector<64x128xf32>
    %20 = arith.mulf %16, %19 : vector<64x128xf32>
    %cst_17 = arith.constant dense<0.000000e+00> : vector<64xf32>
    %21 = vector.multi_reduction <add>, %20, %cst_17 [1] : vector<64x128xf32> to vector<64xf32>
    %22 = vector.shape_cast %21 : vector<64xf32> to vector<64x1xf32>
    %c0_18 = arith.constant 0 : index
    %c0_19 = arith.constant 0 : index
    %c0_20 = arith.constant 0 : index
    %23 = vector.load %arg8[%c0_18, %c0_19, %c0_20] : memref<1x1x1xf32, #tpu.memory_space<vmem>>, vector<1x1x1xf32>
    %24 = vector.shape_cast %23 : vector<1x1x1xf32> to vector<1x1xf32>
    %25 = vector.broadcast %24 : vector<1x1xf32> to vector<64x1xf32>
    %26 = arith.addf %22, %25 : vector<64x1xf32>
    %c0_21 = arith.constant 0 : index
    %c0_22 = arith.constant 0 : index
    %c0_23 = arith.constant 0 : index
    %27 = vector.load %arg9[%c0_21, %c0_22, %c0_23] : memref<1x64x1xf32, #tpu.memory_space<vmem>>, vector<1x64x1xf32>
    %28 = vector.shape_cast %27 : vector<1x64x1xf32> to vector<64x1xf32>
    %29 = vector.shape_cast %26 : vector<64x1xf32> to vector<1x64x1xf32>
    tpu.vector_store %arg9[%c0_21, %c0_22, %c0_23], %29 {strides = array<i32>} : memref<1x64x1xf32, #tpu.memory_space<vmem>>, vector<1x64x1xf32>,
    return
  }
  func.func @transform_0(%arg0: i32, %arg1: i32) -> (i32, i32) {
    %c0_i32 = arith.constant 0 : i32
    %c0_i32_0 = arith.constant 0 : i32
    return %arg1, %c0_i32 : i32, i32
  }
  func.func @transform_1(%arg0: i32, %arg1: i32) -> (i32, i32, i32) {
    %c0_i32 = arith.constant 0 : i32
    %c0_i32_0 = arith.constant 0 : i32
    %c0_i32_1 = arith.constant 0 : i32
    return %arg0, %c0_i32, %c0_i32_0 : i32, i32, i32
  }
  func.func @transform_2(%arg0: i32, %arg1: i32) -> (i32, i32, i32) {
    %c0_i32 = arith.constant 0 : i32
    %c0_i32_0 = arith.constant 0 : i32
    %c0_i32_1 = arith.constant 0 : i32
    return %arg0, %c0_i32, %c0_i32_0 : i32, i32, i32
  }
  func.func @transform_3(%arg0: i32, %arg1: i32) -> (i32, i32, i32) {
    %c0_i32 = arith.constant 0 : i32
    %c0_i32_0 = arith.constant 0 : i32
    %c0_i32_1 = arith.constant 0 : i32
    return %arg0, %c0_i32, %c0_i32_0 : i32, i32, i32
  }
  func.func @transform_4(%arg0: i32, %arg1: i32) -> (i32, i32, i32) {
    %c0_i32 = arith.constant 0 : i32
    %c0_i32_0 = arith.constant 0 : i32
    %c0_i32_1 = arith.constant 0 : i32
    return %arg0, %c0_i32, %c0_i32_0 : i32, i32, i32
  }
  func.func @transform_5(%arg0: i32, %arg1: i32) -> (i32, i32, i32) {
    %c0_i32 = arith.constant 0 : i32
    %c0_i32_0 = arith.constant 0 : i32
    %c0_i32_1 = arith.constant 0 : i32
    return %arg0, %c0_i32, %c0_i32_0 : i32, i32, i32
  }
  func.func @transform_6(%arg0: i32, %arg1: i32) -> (i32, i32, i32) {
    %c0_i32 = arith.constant 0 : i32
    %c0_i32_0 = arith.constant 0 : i32
    %c0_i32_1 = arith.constant 0 : i32
    return %arg0, %c0_i32, %c0_i32_0 : i32, i32, i32
  }
  func.func @transform_7(%arg0: i32, %arg1: i32) -> (i32, i32, i32) {
    %c0_i32 = arith.constant 0 : i32
    %c0_i32_0 = arith.constant 0 : i32
    return %arg0, %arg1, %c0_i32 : i32, i32, i32
  }
}

</mosaic_0001>

<llo_original>
// kernel: tpu_custom_call.1
$region0: #{tpu_custom_call.1}
  #allocation0 [shape = 'u32[]', space=smem, size = 0x4, offset = 0x4, fixed_abs, tag = 'smem constant byte address 0x4 - core index']
  #allocation1 [shape = 'u32[144,128]{1,0:T(1,128)}', space=vmem, size = 0x12000, scoped, tag = 'internal scratch']
  %s0 = inlined_call_operand.vmem [shape: f32[64,8], index: 0, kind: input, shape index: {}]
  %s1 = inlined_call_operand.vmem [shape: f32[8,8,128], index: 1, kind: input, shape index: {}]
  %s2 = inlined_call_operand.vmem [shape: f32[8,1,128], index: 2, kind: input, shape index: {}]
  %s3 = inlined_call_operand.hbm [shape: f32[8,128,128], index: 3, kind: input, shape index: {}]
  %s4 = inlined_call_operand.vmem [shape: f32[8,1,128], index: 4, kind: input, shape index: {}]
  %s5 = inlined_call_operand.vmem [shape: f32[8,1,128], index: 5, kind: input, shape index: {}]
  %s6 = inlined_call_operand.vmem [shape: f32[8,1,1], index: 6, kind: input, shape index: {}]
  %s7 = inlined_call_operand.vmem [shape: f32[8,64,1], index: 7, kind: output, shape index: {}]
  %s8 = sld [smem:[#allocation0]]
  $region65: #{tpu_custom_call.1} parent=0
    _
  %s10 = ssub.s32 1, %s8
  %s11 = scalar_select 0, %s10, %s8
  $region1: #{tpu_custom_call.1} parent=0
    #allocation2 [shape = 'u8[131072]{0}', space=vmem, size = 0x20000, scoped, tag = 'input window, operand 3']
    #allocation3 [shape = 's32[2]{0}', space=sflag, size = 0x8, scoped, tag = 'scoped memory for tpu_custom_call.1']
    %12 = vsyncpa [#allocation3], 0
    %s13 = scalar_lea.sflag [#allocation3], 1
    %14 = vsyncpa %s13, 0
    loop: start=0, step=1, limit=10
    $region2: #{tpu_custom_call.1} parent=1 // loop_pre_header
      _
    $region3: #{tpu_custom_call.1} parent=1 // loop_header
      %s16 = sphi 0, %s20
      %p17 = scmp.ge.s32.totalorder %s16, 10
      %s23 = sphi 0, %s35
      %s24 = sphi 0, %s31
      %s25 = sphi 0, %s23
      %s26 = sphi 0, %s24
      %s27 = sphi 0, %s25
      %s28 = sphi 0, %s26
      %s38 = sphi 0, %s40
      %s41 = sphi 0, %s38
      %s42 = sphi 0, %s41
      %s58 = sphi 0, %s42
      %s64 = sphi 0, %s66
      %s67 = sphi 0, %s64
      %s68 = sphi 0, %s67
      %s84 = sphi 0, %s68
      %s90 = sphi 0, %s92
      %s93 = sphi 0, %s90
      %s94 = sphi 0, %s93
      %s110 = sphi 0, %s94
      %s116 = sphi 0, %s118
      %s119 = sphi 0, %s116
      %s120 = sphi 0, %s119
      %s136 = sphi 0, %s120
      %s142 = sphi 0, %s144
      %s145 = sphi 0, %s142
      %s146 = sphi 0, %s145
      %s162 = sphi 0, %s146
      %s168 = sphi 0, %s170
      %s171 = sphi 0, %s168
      %s172 = sphi 0, %s171
      %s188 = sphi 0, %s172
      %s194 = sphi 0, %s196
      %s197 = sphi 0, %s194
      %s198 = sphi 0, %s197
      %s214 = sphi 0, %s198
      %s222 = sphi 0, %s224
      %s225 = sphi 0, %s222
      %s226 = sphi 0, %s225
      %s242 = sphi 0, %s226
    $region4: #{tpu_custom_call.1} parent=1 // loop_header_branch
      %19 = sbr.rel (%p17) target = $region8
    $region5: #{tpu_custom_call.1} parent=1 // loop_body
      %s21 = ssub.s32 %s16, 1
      %s22 = ssub.s32 %s16, 2
      %s29 = sadd.s32 1, %s24
      %p30 = scmp.ge.s32.totalorder %s29, 1
      %s31 = scalar_select %p30, 0, %s29
      %s32 = sadd.s32 1, %s23
      %s33 = scalar_select %p30, %s32, %s23
      %p34 = scmp.ge.s32.totalorder %s33, 8
      %s35 = scalar_select %p34, 0, %s33
      %s36 = ssub.s32 %s24, %s31
      %p37 = scmp.eq.s32.totalorder %s36, 0
      %s39 = sadd.s32 %s38, 1
      %s40 = scalar_select %p37, %s38, %s39
      %p43 = pneg %p37
      %p44 = scmp.eq.s32.totalorder %s16, 7
      %p45 = por %p43, %p44
      %p46 = scmp.ne.s32.totalorder %s38, %s41
      %p47 = scmp.eq.s32.totalorder %s16, 0
      %p48 = por %p46, %p47
      %p49 = scmp.ne.s32.totalorder %s38, %s41
      %p50 = scmp.eq.s32.totalorder %s21, 7
      %p51 = por %p49, %p50
      %p52 = scmp.ne.s32.totalorder %s41, %s42
      %p53 = scmp.eq.s32.totalorder %s21, 0
      %p54 = por %p52, %p53
      %p55 = scmp.ne.s32.totalorder %s41, %s42
      %p56 = scmp.eq.s32.totalorder %s22, 7
      %p57 = por %p55, %p56
      %p59 = scmp.ne.s32.totalorder %s42, %s58
      %p60 = scmp.eq.s32.totalorder %s22, 0
      %p61 = por %p59, %p60
      %s62 = ssub.s32 %s23, %s35
      %p63 = scmp.eq.s32.totalorder %s62, 0
      %s65 = sadd.s32 %s64, 1
      %s66 = scalar_select %p63, %s64, %s65
      %p69 = pneg %p63
      %p70 = scmp.eq.s32.totalorder %s16, 7
      %p71 = por %p69, %p70
      %p72 = scmp.ne.s32.totalorder %s64, %s67
      %p73 = scmp.eq.s32.totalorder %s16, 0
      %p74 = por %p72, %p73
      %p75 = scmp.ne.s32.totalorder %s64, %s67
      %p76 = scmp.eq.s32.totalorder %s21, 7
      %p77 = por %p75, %p76
      %p78 = scmp.ne.s32.totalorder %s67, %s68
      %p79 = scmp.eq.s32.totalorder %s21, 0
      %p80 = por %p78, %p79
      %p81 = scmp.ne.s32.totalorder %s67, %s68
      %p82 = scmp.eq.s32.totalorder %s22, 7
      %p83 = por %p81, %p82
      %p85 = scmp.ne.s32.totalorder %s68, %s84
      %p86 = scmp.eq.s32.totalorder %s22, 0
      %p87 = por %p85, %p86
      %s88 = ssub.s32 %s23, %s35
      %p89 = scmp.eq.s32.totalorder %s88, 0
      %s91 = sadd.s32 %s90, 1
      %s92 = scalar_select %p89, %s90, %s91
      %p95 = pneg %p89
      %p96 = scmp.eq.s32.totalorder %s16, 7
      %p97 = por %p95, %p96
      %p98 = scmp.ne.s32.totalorder %s90, %s93
      %p99 = scmp.eq.s32.totalorder %s16, 0
      %p100 = por %p98, %p99
      %p101 = scmp.ne.s32.totalorder %s90, %s93
      %p102 = scmp.eq.s32.totalorder %s21, 7
      %p103 = por %p101, %p102
      %p104 = scmp.ne.s32.totalorder %s93, %s94
      %p105 = scmp.eq.s32.totalorder %s21, 0
      %p106 = por %p104, %p105
      %p107 = scmp.ne.s32.totalorder %s93, %s94
      %p108 = scmp.eq.s32.totalorder %s22, 7
      %p109 = por %p107, %p108
      %p111 = scmp.ne.s32.totalorder %s94, %s110
      %p112 = scmp.eq.s32.totalorder %s22, 0
      %p113 = por %p111, %p112
      %s114 = ssub.s32 %s23, %s35
      %p115 = scmp.eq.s32.totalorder %s114, 0
      %s117 = sadd.s32 %s116, 1
      %s118 = scalar_select %p115, %s116, %s117
      %p121 = pneg %p115
      %p122 = scmp.eq.s32.totalorder %s16, 7
      %p123 = por %p121, %p122
      %p124 = scmp.ne.s32.totalorder %s116, %s119
      %p125 = scmp.eq.s32.totalorder %s16, 0
      %p126 = por %p124, %p125
      %p127 = scmp.ne.s32.totalorder %s116, %s119
      %p128 = scmp.eq.s32.totalorder %s21, 7
      %p129 = por %p127, %p128
      %p130 = scmp.ne.s32.totalorder %s119, %s120
      %p131 = scmp.eq.s32.totalorder %s21, 0
      %p132 = por %p130, %p131
      %p133 = scmp.ne.s32.totalorder %s119, %s120
      %p134 = scmp.eq.s32.totalorder %s22, 7
      %p135 = por %p133, %p134
      %p137 = scmp.ne.s32.totalorder %s120, %s136
      %p138 = scmp.eq.s32.totalorder %s22, 0
      %p139 = por %p137, %p138
      %s140 = ssub.s32 %s23, %s35
      %p141 = scmp.eq.s32.totalorder %s140, 0
      %s143 = sadd.s32 %s142, 1
      %s144 = scalar_select %p141, %s142, %s143
      %p147 = pneg %p141
      %p148 = scmp.eq.s32.totalorder %s16, 7
      %p149 = por %p147, %p148
      %p150 = scmp.ne.s32.totalorder %s142, %s145
      %p151 = scmp.eq.s32.totalorder %s16, 0
      %p152 = por %p150, %p151
      %p153 = scmp.ne.s32.totalorder %s142, %s145
      %p154 = scmp.eq.s32.totalorder %s21, 7
      %p155 = por %p153, %p154
      %p156 = scmp.ne.s32.totalorder %s145, %s146
      %p157 = scmp.eq.s32.totalorder %s21, 0
      %p158 = por %p156, %p157
      %p159 = scmp.ne.s32.totalorder %s145, %s146
      %p160 = scmp.eq.s32.totalorder %s22, 7
      %p161 = por %p159, %p160
      %p163 = scmp.ne.s32.totalorder %s146, %s162
      %p164 = scmp.eq.s32.totalorder %s22, 0
      %p165 = por %p163, %p164
      %s166 = ssub.s32 %s23, %s35
      %p167 = scmp.eq.s32.totalorder %s166, 0
      %s169 = sadd.s32 %s168, 1
      %s170 = scalar_select %p167, %s168, %s169
      %p173 = pneg %p167
      %p174 = scmp.eq.s32.totalorder %s16, 7
      %p175 = por %p173, %p174
      %p176 = scmp.ne.s32.totalorder %s168, %s171
      %p177 = scmp.eq.s32.totalorder %s16, 0
      %p178 = por %p176, %p177
      %p179 = scmp.ne.s32.totalorder %s168, %s171
      %p180 = scmp.eq.s32.totalorder %s21, 7
      %p181 = por %p179, %p180
      %p182 = scmp.ne.s32.totalorder %s171, %s172
      %p183 = scmp.eq.s32.totalorder %s21, 0
      %p184 = por %p182, %p183
      %p185 = scmp.ne.s32.totalorder %s171, %s172
      %p186 = scmp.eq.s32.totalorder %s22, 7
      %p187 = por %p185, %p186
      %p189 = scmp.ne.s32.totalorder %s172, %s188
      %p190 = scmp.eq.s32.totalorder %s22, 0
      %p191 = por %p189, %p190
      %s192 = ssub.s32 %s23, %s35
      %p193 = scmp.eq.s32.totalorder %s192, 0
      %s195 = sadd.s32 %s194, 1
      %s196 = scalar_select %p193, %s194, %s195
      %p199 = pneg %p193
      %p200 = scmp.eq.s32.totalorder %s16, 7
      %p201 = por %p199, %p200
      %p202 = scmp.ne.s32.totalorder %s194, %s197
      %p203 = scmp.eq.s32.totalorder %s16, 0
      %p204 = por %p202, %p203
      %p205 = scmp.ne.s32.totalorder %s194, %s197
      %p206 = scmp.eq.s32.totalorder %s21, 7
      %p207 = por %p205, %p206
      %p208 = scmp.ne.s32.totalorder %s197, %s198
      %p209 = scmp.eq.s32.totalorder %s21, 0
      %p210 = por %p208, %p209
      %p211 = scmp.ne.s32.totalorder %s197, %s198
      %p212 = scmp.eq.s32.totalorder %s22, 7
      %p213 = por %p211, %p212
      %p215 = scmp.ne.s32.totalorder %s198, %s214
      %p216 = scmp.eq.s32.totalorder %s22, 0
      %p217 = por %p215, %p216
      %s218 = ssub.s32 %s23, %s35
      %s219 = ssub.s32 %s24, %s31
      %s220 = sor.u32 %s218, %s219
      %p221 = scmp.eq.s32.totalorder %s220, 0
      %s223 = sadd.s32 %s222, 1
      %s224 = scalar_select %p221, %s222, %s223
      %p227 = pneg %p221
      %p228 = scmp.eq.s32.totalorder %s16, 7
      %p229 = por %p227, %p228
      %p230 = scmp.ne.s32.totalorder %s222, %s225
      %p231 = scmp.eq.s32.totalorder %s16, 0
      %p232 = por %p230, %p231
      %p233 = scmp.ne.s32.totalorder %s222, %s225
      %p234 = scmp.eq.s32.totalorder %s21, 7
      %p235 = por %p233, %p234
      %p236 = scmp.ne.s32.totalorder %s225, %s226
      %p237 = scmp.eq.s32.totalorder %s21, 0
      %p238 = por %p236, %p237
      %p239 = scmp.ne.s32.totalorder %s225, %s226
      %p240 = scmp.eq.s32.totalorder %s22, 7
      %p241 = por %p239, %p240
      %p243 = scmp.ne.s32.totalorder %s226, %s242
      %p244 = scmp.eq.s32.totalorder %s22, 0
      %p245 = por %p243, %p244
      %p246 = scmp.le.s32.totalorder 1, %s16
      %p247 = scmp.lt.s32.totalorder %s16, 9
      %p248 = pnand %p246, %p247
      %p249 = pneg %p248
      // Predicated region
      $region9: #{tpu_custom_call.1} parent=5 // pred_check
        _
      $region10: #{tpu_custom_call.1} parent=5 // pred_check_branch
        %251 = sbr.rel (%p248) target = $region12
      $region11: #{tpu_custom_call.1} parent=5 // pred_region
        %s252 = ssub.s32 %s16, 1
        // Predicated region
        $region13: #{tpu_custom_call.1} parent=11 // pred_check
          %p253 = pneg %p54
        $region14: #{tpu_custom_call.1} parent=11 // pred_check_branch
          %255 = sbr.rel (%p253) target = $region16
        $region15: #{tpu_custom_call.1} parent=11 // pred_region
          %s256 = smul.u32 8, %s26
          %p257 = scmp.lt.s32.totalorder %s256, 7
          %s258 = scalar_select %p257, %s256, 7
          %s259 = smul.addr %s258, 8
          %s260 = scalar_lea.vmem %s0, %s259
          %s261 = smul.u32 8, %s26
        $region16: #{tpu_custom_call.1} parent=11 // pred_fallthru
          _
      $region12: #{tpu_custom_call.1} parent=5 // pred_fallthru
        _
      %p262 = scmp.lt.s32.totalorder %s16, 8
      // Predicated region
      $region17: #{tpu_custom_call.1} parent=5 // pred_check
        %p263 = pneg %p262
      $region18: #{tpu_custom_call.1} parent=5 // pred_check_branch
        %265 = sbr.rel (%p263) target = $region20
      $region19: #{tpu_custom_call.1} parent=5 // pred_region
        // Predicated region
        $region21: #{tpu_custom_call.1} parent=19 // pred_check
          %p266 = pneg %p74
        $region22: #{tpu_custom_call.1} parent=19 // pred_check_branch
          %268 = sbr.rel (%p266) target = $region24
        $region23: #{tpu_custom_call.1} parent=19 // pred_region
          %p269 = scmp.lt.s32.totalorder %s23, 7
          %s270 = scalar_select %p269, %s23, 7
          %s271 = smul.addr %s270, 8
          %s272 = scalar_lea.vmem %s1, %s271
        $region24: #{tpu_custom_call.1} parent=19 // pred_fallthru
          _
        // Predicated region
        $region25: #{tpu_custom_call.1} parent=19 // pred_check
          %p273 = pneg %p100
        $region26: #{tpu_custom_call.1} parent=19 // pred_check_branch
          %275 = sbr.rel (%p273) target = $region28
        $region27: #{tpu_custom_call.1} parent=19 // pred_region
          %p276 = scmp.lt.s32.totalorder %s23, 7
          %s277 = scalar_select %p276, %s23, 7
          %s278 = scalar_lea.vmem %s2, %s277
        $region28: #{tpu_custom_call.1} parent=19 // pred_fallthru
          _
        // Predicated region
        $region29: #{tpu_custom_call.1} parent=19 // pred_check
          %p279 = pneg %p126
        $region30: #{tpu_custom_call.1} parent=19 // pred_check_branch
          %281 = sbr.rel (%p279) target = $region32
        $region31: #{tpu_custom_call.1} parent=19 // pred_region
          %s282 = sand.u32 %s116, 1
          %s283 = scalar_lea.sflag [#allocation3], %s282
          %s284 = sand.u32 %s116, 1
          %s285 = smul.addr %s284, 128
          %s286 = scalar_lea.vmem [#allocation2], %s285
          %s288 = ssub.s32 2048, 2048
          %289 = vsyncadd %s283, %s288
          %s290 = smul.addr %s23, 16
          %s291 = smul.addr %s290, 128
          %s292 = scalar_lea.hbm %s3, %s291
          %s293 = sshll.u32 %s286, 4
          %s294 = int_to_ptr.vmem [resolvable:$true] %s293
          %299 = dma.hbm_to_vmem [thread:$0]  %s292, 2048, %s294, %s283, 128, 128, 8
        $region32: #{tpu_custom_call.1} parent=19 // pred_fallthru
          _
        // Predicated region
        $region33: #{tpu_custom_call.1} parent=19 // pred_check
          %p300 = pneg %p152
        $region34: #{tpu_custom_call.1} parent=19 // pred_check_branch
          %302 = sbr.rel (%p300) target = $region36
        $region35: #{tpu_custom_call.1} parent=19 // pred_region
          %p303 = scmp.lt.s32.totalorder %s23, 7
          %s304 = scalar_select %p303, %s23, 7
          %s305 = scalar_lea.vmem %s4, %s304
        $region36: #{tpu_custom_call.1} parent=19 // pred_fallthru
          _
        // Predicated region
        $region37: #{tpu_custom_call.1} parent=19 // pred_check
          %p306 = pneg %p178
        $region38: #{tpu_custom_call.1} parent=19 // pred_check_branch
          %308 = sbr.rel (%p306) target = $region40
        $region39: #{tpu_custom_call.1} parent=19 // pred_region
          %p309 = scmp.lt.s32.totalorder %s23, 7
          %s310 = scalar_select %p309, %s23, 7
          %s311 = scalar_lea.vmem %s5, %s310
        $region40: #{tpu_custom_call.1} parent=19 // pred_fallthru
          _
        // Predicated region
        $region41: #{tpu_custom_call.1} parent=19 // pred_check
          %p312 = pneg %p204
        $region42: #{tpu_custom_call.1} parent=19 // pred_check_branch
          %314 = sbr.rel (%p312) target = $region44
        $region43: #{tpu_custom_call.1} parent=19 // pred_region
          %p315 = scmp.lt.s32.totalorder %s23, 7
          %s316 = scalar_select %p315, %s23, 7
          %s317 = scalar_lea.vmem %s6, %s316
        $region44: #{tpu_custom_call.1} parent=19 // pred_fallthru
          _
      $region20: #{tpu_custom_call.1} parent=5 // pred_fallthru
        _
      %p318 = scmp.le.s32.totalorder 1, %s16
      %p319 = scmp.lt.s32.totalorder %s16, 9
      %p320 = pnand %p318, %p319
      %p321 = pneg %p320
      // Predicated region
      $region45: #{tpu_custom_call.1} parent=5 // pred_check
        _
      $region46: #{tpu_custom_call.1} parent=5 // pred_check_branch
        %323 = sbr.rel (%p320) target = $region48
      $region47: #{tpu_custom_call.1} parent=5 // pred_region
        %s324 = ssub.s32 %s16, 1
        %s325 = sand.u32 %s119, 1
        %s326 = scalar_lea.sflag [#allocation3], %s325
        %s327 = sand.u32 %s119, 1
        %s328 = smul.addr %s327, 128
        %s329 = scalar_lea.vmem [#allocation2], %s328
        // Predicated region
        $region49: #{tpu_custom_call.1} parent=47 // pred_check
          %p330 = pneg %p132
        $region50: #{tpu_custom_call.1} parent=47 // pred_check_branch
          %332 = sbr.rel (%p330) target = $region52
        $region51: #{tpu_custom_call.1} parent=47 // pred_region
          %333 = dma.done %s326, 2048
        $region52: #{tpu_custom_call.1} parent=47 // pred_fallthru
          _
        %s334 = smul.u32 8, %s26
        %p335 = scmp.lt.s32.totalorder %s334, 7
        %s336 = scalar_select %p335, %s334, 7
        %s337 = smul.addr %s336, 8
        %s338 = scalar_lea.vmem %s0, %s337
        %p339 = pneg %p54
        %p340 = pneg %p51
        %p341 = scmp.lt.s32.totalorder %s25, 7
        %s342 = scalar_select %p341, %s25, 7
        %s343 = smul.addr %s342, 8
        %s344 = scalar_lea.vmem %s1, %s343
        %p345 = pneg %p80
        %p346 = pneg %p77
        %p347 = scmp.lt.s32.totalorder %s25, 7
        %s348 = scalar_select %p347, %s25, 7
        %s349 = scalar_lea.vmem %s2, %s348
        %p350 = pneg %p106
        %p351 = pneg %p103
        %s352 = sand.u32 %s119, 1
        %s353 = scalar_lea.sflag [#allocation3], %s352
        %s354 = sand.u32 %s119, 1
        %s355 = smul.addr %s354, 128
        %s356 = scalar_lea.vmem [#allocation2], %s355
        %p357 = pneg %p132
        %p358 = pneg %p129
        %p359 = scmp.lt.s32.totalorder %s25, 7
        %s360 = scalar_select %p359, %s25, 7
        %s361 = scalar_lea.vmem %s4, %s360
        %p362 = pneg %p158
        %p363 = pneg %p155
        %p364 = scmp.lt.s32.totalorder %s25, 7
        %s365 = scalar_select %p364, %s25, 7
        %s366 = scalar_lea.vmem %s5, %s365
        %p367 = pneg %p184
        %p368 = pneg %p181
        %p369 = scmp.lt.s32.totalorder %s25, 7
        %s370 = scalar_select %p369, %s25, 7
        %s371 = scalar_lea.vmem %s6, %s370
        %p372 = pneg %p210
        %p373 = pneg %p207
        %p374 = pneg %p238
        %p375 = pneg %p235
        %s376 = smul.u32 8, %s26
        %p377 = scmp.lt.s32.totalorder %s25, 7
        %s378 = scalar_select %p377, %s25, 7
        %p379 = scmp.lt.s32.totalorder %s376, 7
        %s380 = scalar_select %p379, %s376, 7
        %s381 = smul.addr %s378, 8
        %s382 = sadd.s32 %s380, %s381
        %s383 = smul.addr %s382, 8
        %s384 = scalar_lea.vmem %s7, %s383
        %s385 = smul.u32 8, %s26
        %p386 = scmp.lt.s32.totalorder %s385, 7
        %s387 = scalar_select %p386, %s385, 7
        %s388 = smul.addr %s387, 8
        %s389 = scalar_lea.vmem %s0, %s388
        %s390 = smul.u32 8, %s26
        %p391 = scmp.lt.s32.totalorder %s25, 7
        %s392 = scalar_select %p391, %s25, 7
        %s393 = smul.addr %s392, 8
        %s394 = scalar_lea.vmem %s1, %s393
        %p395 = scmp.lt.s32.totalorder %s25, 7
        %s396 = scalar_select %p395, %s25, 7
        %s397 = scalar_lea.vmem %s2, %s396
        %p398 = scmp.lt.s32.totalorder %s25, 7
        %s399 = scalar_select %p398, %s25, 7
        %s400 = scalar_lea.vmem %s4, %s399
        %p401 = scmp.lt.s32.totalorder %s25, 7
        %s402 = scalar_select %p401, %s25, 7
        %s403 = scalar_lea.vmem %s5, %s402
        %p404 = scmp.lt.s32.totalorder %s25, 7
        %s405 = scalar_select %p404, %s25, 7
        %s406 = scalar_lea.vmem %s6, %s405
        %s407 = smul.u32 8, %s26
        %p408 = scmp.lt.s32.totalorder %s25, 7
        %s409 = scalar_select %p408, %s25, 7
        %p410 = scmp.lt.s32.totalorder %s407, 7
        %s411 = scalar_select %p410, %s407, 7
        %s412 = smul.addr %s409, 8
        %s413 = sadd.s32 %s411, %s412
        %s414 = smul.addr %s413, 8
        %s415 = scalar_lea.vmem %s7, %s414
        %s416 = smul.u32 8, %s26
        %v417 = vld [vmem:[%s389] sm:$0xff]
        %v418 = vld [vmem:[%s389 + $0x8] sm:$0xff]
        %v419 = vld [vmem:[%s389 + $0x10] sm:$0xff]
        %v420 = vld [vmem:[%s389 + $0x18] sm:$0xff]
        %v421 = vld [vmem:[%s389 + $0x20] sm:$0xff]
        %v422 = vld [vmem:[%s389 + $0x28] sm:$0xff]
        %v423 = vld [vmem:[%s389 + $0x30] sm:$0xff]
        %v424 = vld [vmem:[%s389 + $0x38] sm:$0xff]
        %v425 = vld [vmem:[%s394] sm:$0xff]
        %v426 = vld [vmem:[%s397] sm:$0x1]
        %v428 = vlaneseq
        %v429 = vshrl.u32 %v428, 7
        %v430 = vsub.s32 0, %v429
        %v431 = vrot.slane %v426, %v430
        %vm433 = vcmask 64512
        %v435 = vsel %vm433, %v417, 0
        %v438 = vsel %vm433, %v418, 0
        %v441 = vsel %vm433, %v419, 0
        %v444 = vsel %vm433, %v420, 0
        %v447 = vsel %vm433, %v421, 0
        %v450 = vsel %vm433, %v422, 0
        %v453 = vsel %vm433, %v423, 0
        %v456 = vsel %vm433, %v424, 0
        %458 = vmatprep.subr.mxu0 0.0
        %459 = vmatpush1.msra.mxu0 %v425
        %460 = vmatprep.subr.mxu0 0.0
        %461 = vmatpush1.msra.mxu0 0.0
        %462 = vmatprep.subr.mxu0 0.0
        %463 = vmatpush1.msra.mxu0 0.0
        %464 = vmatprep.subr.mxu0 0.0
        %465 = vmatpush1.msra.mxu0 0.0
        %466 = vmatprep.subr.mxu0 0.0
        %467 = vmatpush1.msra.mxu0 0.0
        %468 = vmatprep.subr.mxu0 0.0
        %469 = vmatpush1.msra.mxu0 0.0
        %470 = vmatprep.subr.mxu0 0.0
        %471 = vmatpush1.msra.mxu0 0.0
        %472 = vmatprep.subr.mxu0 0.0
        %473 = vmatpush1.msra.mxu0 0.0
        %474 = vmatprep.subr.mxu0 0.0
        %475 = vmatpush1.msra.mxu0 0.0
        %476 = vmatprep.subr.mxu0 0.0
        %477 = vmatpush1.msra.mxu0 0.0
        %478 = vmatprep.subr.mxu0 0.0
        %479 = vmatpush1.msra.mxu0 0.0
        %480 = vmatprep.subr.mxu0 0.0
        %481 = vmatpush1.msra.mxu0 0.0
        %482 = vmatprep.subr.mxu0 0.0
        %483 = vmatpush1.msra.mxu0 0.0
        %484 = vmatprep.subr.mxu0 0.0
        %485 = vmatpush1.msra.mxu0 0.0
        %486 = vmatprep.subr.mxu0 0.0
        %487 = vmatpush1.msra.mxu0 0.0
        %488 = vmatprep.subr.mxu0 0.0
        %489 = vmatpush1.msra.mxu0 0.0
        %490 = vmatprep.subr.mxu0 0.0
        %491 = vmatpush1.msra.mxu0 0.0
        %492 = vmatprep.subr.mxu0 0.0
        %493 = vmatpush1.msra.mxu0 0.0
        %494 = vmatprep.subr.mxu0 0.0
        %495 = vmatpush1.msra.mxu0 0.0
        %496 = vmatprep.subr.mxu0 0.0
        %497 = vmatpush1.msra.mxu0 0.0
        %498 = vmatprep.subr.mxu0 0.0
        %499 = vmatpush1.msra.mxu0 0.0
        %500 = vmatprep.subr.mxu0 0.0
        %501 = vmatpush1.msra.mxu0 0.0
        %502 = vmatprep.subr.mxu0 0.0
        %503 = vmatpush1.msra.mxu0 0.0
        %504 = vmatprep.subr.mxu0 0.0
        %505 = vmatpush1.msra.mxu0 0.0
        %506 = vmatprep.subr.mxu0 0.0
        %507 = vmatpush1.msra.mxu0 0.0
        %508 = vmatprep.subr.mxu0 0.0
        %509 = vmatpush1.msra.mxu0 0.0
        %510 = vmatprep.subr.mxu0 0.0
        %511 = vmatpush1.msra.mxu0 0.0
        %512 = vmatprep.subr.mxu0 0.0
        %513 = vmatpush1.msra.mxu0 0.0
        %514 = vmatprep.subr.mxu0 0.0
        %515 = vmatpush1.msra.mxu0 0.0
        %516 = vmatprep.subr.mxu0 0.0
        %517 = vmatpush1.msra.mxu0 0.0
        %518 = vmatprep.subr.mxu0 0.0
        %519 = vmatpush1.msra.mxu0 0.0
        %520 = vmatprep.subr.mxu0 0.0
        %521 = vmatpush1.msra.mxu0 0.0
        %522 = vmatprep.mubr.f32.mxu0 0.0
        %523 = vmatmul.mubr.f32.gmra.mrb[0].mxu0 %v435
        %v524 = vpop.f32.mrb[0].mxu0
        %v525 = vadd.f32 %v431, %v524
        %v526 = vpop.f32.mrb[0].mxu0
        %527 = vmatprep.mubr.f32.mxu0 0.0
        %528 = vmatmul.mubr.f32.gmra.mrb[0].mxu0 %v438
        %v529 = vpop.f32.mrb[0].mxu0
        %v530 = vadd.f32 %v431, %v529
        %v531 = vpop.f32.mrb[0].mxu0
        %532 = vmatprep.mubr.f32.mxu0 0.0
        %533 = vmatmul.mubr.f32.gmra.mrb[0].mxu0 %v441
        %v534 = vpop.f32.mrb[0].mxu0
        %v535 = vadd.f32 %v431, %v534
        %v536 = vpop.f32.mrb[0].mxu0
        %537 = vmatprep.mubr.f32.mxu0 0.0
        %538 = vmatmul.mubr.f32.gmra.mrb[0].mxu0 %v444
        %v539 = vpop.f32.mrb[0].mxu0
        %v540 = vadd.f32 %v431, %v539
        %v541 = vpop.f32.mrb[0].mxu0
        %542 = vmatprep.mubr.f32.mxu0 0.0
        %543 = vmatmul.mubr.f32.gmra.mrb[0].mxu0 %v447
        %v544 = vpop.f32.mrb[0].mxu0
        %v545 = vadd.f32 %v431, %v544
        %v546 = vpop.f32.mrb[0].mxu0
        %547 = vmatprep.mubr.f32.mxu0 0.0
        %548 = vmatmul.mubr.f32.gmra.mrb[0].mxu0 %v450
        %v549 = vpop.f32.mrb[0].mxu0
        %v550 = vadd.f32 %v431, %v549
        %v551 = vpop.f32.mrb[0].mxu0
        %552 = vmatprep.mubr.f32.mxu0 0.0
        %553 = vmatmul.mubr.f32.gmra.mrb[0].mxu0 %v453
        %v554 = vpop.f32.mrb[0].mxu0
        %v555 = vadd.f32 %v431, %v554
        %v556 = vpop.f32.mrb[0].mxu0
        %557 = vmatprep.mubr.f32.mxu0 0.0
        %558 = vmatmul.mubr.f32.gmra.mrb[0].mxu0 %v456
        %v559 = vpop.f32.mrb[0].mxu0
        %v560 = vadd.f32 %v431, %v559
        %v561 = vpop.f32.mrb[0].mxu0
        %562 = vdwg.mxu0
        %v563 = vand.u32 2147483647, %v525
        %vm564 = vcmp.le.f32.partialorder %v563, 0.7853982
        %vm565 = vcmp.lt.s32.totalorder %v525, 0
        %v566 = vand.u32 %v525, 2139095040
        %v567 = vshrl.u32 %v566, 23
        %v568 = vsub.s32 %v567, 127
        %v569 = vand.u32 2147483647, %v525
        %v570 = vand.u32 %v569, 8388607
        %v571 = vor.u32 %v570, 8388608
        %v572 = vsub.s32 0, %v571
        %v573 = vadd.s32 %v568, 1
        %vm574 = vcmp.gt.s32.totalorder %v573, 0
        %v575 = vsel %vm574, %v573, 0
        %v576 = vshrl.u32 %v575, 5
        %v577 = vand.u32 %v575, 31
        %v578 = vsub.s32 32, %v577
        %v579 = vshrl.u32 683565275, %v578
        %v580 = vshll.u32 683565275, %v577
        %v581 = vshrl.u32 2475754826, %v578
        %v582 = vor.u32 %v580, %v581
        %v583 = vshll.u32 2475754826, %v577
        %v584 = vshrl.u32 2131351028, %v578
        %v585 = vor.u32 %v583, %v584
        %v586 = vshll.u32 2131351028, %v577
        %v587 = vshrl.u32 2102212464, %v578
        %v588 = vor.u32 %v586, %v587
        %v589 = vshll.u32 2102212464, %v577
        %v590 = vshrl.u32 920167782, %v578
        %v591 = vor.u32 %v589, %v590
        %v592 = vshll.u32 920167782, %v577
        %v593 = vshrl.u32 1326507024, %v578
        %v594 = vor.u32 %v592, %v593
        %vm595 = vcmp.lt.s32.totalorder %v576, 1
        %vm596 = vcmp.lt.s32.totalorder %v576, 2
        %vm597 = vcmp.lt.s32.totalorder %v576, 3
        %vm598 = vcmp.lt.s32.totalorder %v576, 4
        %v599 = vsel %vm595, %v579, %v582
        %v600 = vsel %vm598, %v588, 2102212464
        %v601 = vsel %vm597, %v585, %v600
        %v602 = vsel %vm596, %v599, %v601
        %v603 = vsel %vm595, %v582, %v585
        %v604 = vsel %vm598, %v591, 920167782
        %v605 = vsel %vm597, %v588, %v604
        %v606 = vsel %vm596, %v603, %v605
        %v607 = vsel %vm595, %v585, %v588
        %v608 = vsel %vm598, %v594, 1326507024
        %v609 = vsel %vm597, %v591, %v608
        %v610 = vsel %vm596, %v607, %v609
        %v611 = vshll.u32 %v571, 8
        %v612 = vmul.u32.u64.compose %v611, %v610
        %v613 = vextract.low.u32 %v612
        %v614 = vextract.high.u32 %v612
        %v615 = vmul.u32.u64.compose %v611, %v606
        %v616 = vextract.low.u32 %v615
        %v617 = vextract.high.u32 %v615
        %v618 = vmul.u32 %v611, %v602
        %v619 = vadd.s32 %v614, %v616
        %vm620 = vc.u32 %v614, %v616
        %v621 = vadd.s32 %v617, 1
        %v622 = vsel %vm620, %v621, %v617
        %v623 = vadd.s32 %v618, %v622
        %v624 = vadd.s32 %v623, 536870912
        %v625 = vshrl.u32 %v624, 30
        %v626 = vshll.u32 %v625, 30
        %v627 = vsub.s32 %v623, %v626
        %vm628 = vcmp.lt.s32.totalorder %v627, 0
        %v629 = vsub.s32 0, %v627
        %v630 = vsel %vm628, %v629, %v627
        %v631 = vclz %v630
        %v632 = vsub.s32 %v631, 2
        %vm633 = vcmp.gt.s32.totalorder 0, %v632
        %v634 = vsel %vm633, 0, %v632
        %v635 = vsub.s32 32, %v634
        %v636 = vshll.u32 %v627, %v634
        %v637 = vshrl.u32 %v619, %v635
        %v638 = vor.u32 %v636, %v637
        %v639 = vsub.s32 4294967266, %v634
        %v640 = vadd.s32 %v639, 127
        %v641 = vshll.u32 %v640, 23
        %v642 = vor.u32 4788187, %v641
        %v643 = vand.u32 2147483647, %v642
        %v645 = vcvt.s32.f32 %v638
        %v646 = vmul.f32 %v645, %v643
        %v647 = vxor.u32 %v646, 2147483648
        %v648 = vsel %vm565, %v647, %v646
        %v649 = vsub.s32 4, %v625
        %v650 = vsel %vm565, %v649, %v625
        %v651 = vsel %vm564, %v525, %v648
        %v652 = vsel %vm564, 0, %v650
        %v653 = vcosq.f32.pop %v651
        %v654 = vsinq.f32.pop %v651
        %vm655 = vweird.f32 %v525
        %v656 = vand.u32 %v652, 3
        %vm657 = vcmp.lt.s32.totalorder %v656, 2
        %vm658 = vcmp.eq.s32.totalorder %v656, 0
        %v659 = vxor.u32 %v654, 2147483648
        %v660 = vsel %vm658, %v653, %v659
        %vm661 = vcmp.eq.s32.totalorder %v656, 2
        %v662 = vxor.u32 %v653, 2147483648
        %v663 = vsel %vm661, %v662, %v654
        %v664 = vsel %vm657, %v660, %v663
        %v665 = vsel %vm655, nan, %v664
        %v666 = vand.u32 2147483647, %v530
        %vm667 = vcmp.le.f32.partialorder %v666, 0.7853982
        %vm668 = vcmp.lt.s32.totalorder %v530, 0
        %v669 = vand.u32 %v530, 2139095040
        %v670 = vshrl.u32 %v669, 23
        %v671 = vsub.s32 %v670, 127
        %v672 = vand.u32 2147483647, %v530
        %v673 = vand.u32 %v672, 8388607
        %v674 = vor.u32 %v673, 8388608
        %v675 = vsub.s32 0, %v674
        %v676 = vadd.s32 %v671, 1
        %vm677 = vcmp.gt.s32.totalorder %v676, 0
        %v678 = vsel %vm677, %v676, 0
        %v679 = vshrl.u32 %v678, 5
        %v680 = vand.u32 %v678, 31
        %v681 = vsub.s32 32, %v680
        %v682 = vshrl.u32 683565275, %v681
        %v683 = vshll.u32 683565275, %v680
        %v684 = vshrl.u32 2475754826, %v681
        %v685 = vor.u32 %v683, %v684
        %v686 = vshll.u32 2475754826, %v680
        %v687 = vshrl.u32 2131351028, %v681
        %v688 = vor.u32 %v686, %v687
        %v689 = vshll.u32 2131351028, %v680
        %v690 = vshrl.u32 2102212464, %v681
        %v691 = vor.u32 %v689, %v690
        %v692 = vshll.u32 2102212464, %v680
        %v693 = vshrl.u32 920167782, %v681
        %v694 = vor.u32 %v692, %v693
        %v695 = vshll.u32 920167782, %v680
        %v696 = vshrl.u32 1326507024, %v681
        %v697 = vor.u32 %v695, %v696
        %vm698 = vcmp.lt.s32.totalorder %v679, 1
        %vm699 = vcmp.lt.s32.totalorder %v679, 2
        %vm700 = vcmp.lt.s32.totalorder %v679, 3
        %vm701 = vcmp.lt.s32.totalorder %v679, 4
        %v702 = vsel %vm698, %v682, %v685
        %v703 = vsel %vm701, %v691, 2102212464
        %v704 = vsel %vm700, %v688, %v703
        %v705 = vsel %vm699, %v702, %v704
        %v706 = vsel %vm698, %v685, %v688
        %v707 = vsel %vm701, %v694, 920167782
        %v708 = vsel %vm700, %v691, %v707
        %v709 = vsel %vm699, %v706, %v708
        %v710 = vsel %vm698, %v688, %v691
        %v711 = vsel %vm701, %v697, 1326507024
        %v712 = vsel %vm700, %v694, %v711
        %v713 = vsel %vm699, %v710, %v712
        %v714 = vshll.u32 %v674, 8
        %v715 = vmul.u32.u64.compose %v714, %v713
        %v716 = vextract.low.u32 %v715
        %v717 = vextract.high.u32 %v715
        %v718 = vmul.u32.u64.compose %v714, %v709
        %v719 = vextract.low.u32 %v718
        %v720 = vextract.high.u32 %v718
        %v721 = vmul.u32 %v714, %v705
        %v722 = vadd.s32 %v717, %v719
        %vm723 = vc.u32 %v717, %v719
        %v724 = vadd.s32 %v720, 1
        %v725 = vsel %vm723, %v724, %v720
        %v726 = vadd.s32 %v721, %v725
        %v727 = vadd.s32 %v726, 536870912
        %v728 = vshrl.u32 %v727, 30
        %v729 = vshll.u32 %v728, 30
        %v730 = vsub.s32 %v726, %v729
        %vm731 = vcmp.lt.s32.totalorder %v730, 0
        %v732 = vsub.s32 0, %v730
        %v733 = vsel %vm731, %v732, %v730
        %v734 = vclz %v733
        %v735 = vsub.s32 %v734, 2
        %vm736 = vcmp.gt.s32.totalorder 0, %v735
        %v737 = vsel %vm736, 0, %v735
        %v738 = vsub.s32 32, %v737
        %v739 = vshll.u32 %v730, %v737
        %v740 = vshrl.u32 %v722, %v738
        %v741 = vor.u32 %v739, %v740
        %v742 = vsub.s32 4294967266, %v737
        %v743 = vadd.s32 %v742, 127
        %v744 = vshll.u32 %v743, 23
        %v745 = vor.u32 4788187, %v744
        %v746 = vand.u32 2147483647, %v745
        %v748 = vcvt.s32.f32 %v741
        %v749 = vmul.f32 %v748, %v746
        %v750 = vxor.u32 %v749, 2147483648
        %v751 = vsel %vm668, %v750, %v749
        %v752 = vsub.s32 4, %v728
        %v753 = vsel %vm668, %v752, %v728
        %v754 = vsel %vm667, %v530, %v751
        %v755 = vsel %vm667, 0, %v753
        %v756 = vcosq.f32.pop %v754
        %v757 = vsinq.f32.pop %v754
        %vm758 = vweird.f32 %v530
        %v759 = vand.u32 %v755, 3
        %vm760 = vcmp.lt.s32.totalorder %v759, 2
        %vm761 = vcmp.eq.s32.totalorder %v759, 0
        %v762 = vxor.u32 %v757, 2147483648
        %v763 = vsel %vm761, %v756, %v762
        %vm764 = vcmp.eq.s32.totalorder %v759, 2
        %v765 = vxor.u32 %v756, 2147483648
        %v766 = vsel %vm764, %v765, %v757
        %v767 = vsel %vm760, %v763, %v766
        %v768 = vsel %vm758, nan, %v767
        %v769 = vand.u32 2147483647, %v535
        %vm770 = vcmp.le.f32.partialorder %v769, 0.7853982
        %vm771 = vcmp.lt.s32.totalorder %v535, 0
        %v772 = vand.u32 %v535, 2139095040
        %v773 = vshrl.u32 %v772, 23
        %v774 = vsub.s32 %v773, 127
        %v775 = vand.u32 2147483647, %v535
        %v776 = vand.u32 %v775, 8388607
        %v777 = vor.u32 %v776, 8388608
        %v778 = vsub.s32 0, %v777
        %v779 = vadd.s32 %v774, 1
        %vm780 = vcmp.gt.s32.totalorder %v779, 0
        %v781 = vsel %vm780, %v779, 0
        %v782 = vshrl.u32 %v781, 5
        %v783 = vand.u32 %v781, 31
        %v784 = vsub.s32 32, %v783
        %v785 = vshrl.u32 683565275, %v784
        %v786 = vshll.u32 683565275, %v783
        %v787 = vshrl.u32 2475754826, %v784
        %v788 = vor.u32 %v786, %v787
        %v789 = vshll.u32 2475754826, %v783
        %v790 = vshrl.u32 2131351028, %v784
        %v791 = vor.u32 %v789, %v790
        %v792 = vshll.u32 2131351028, %v783
        %v793 = vshrl.u32 2102212464, %v784
        %v794 = vor.u32 %v792, %v793
        %v795 = vshll.u32 2102212464, %v783
        %v796 = vshrl.u32 920167782, %v784
        %v797 = vor.u32 %v795, %v796
        %v798 = vshll.u32 920167782, %v783
        %v799 = vshrl.u32 1326507024, %v784
        %v800 = vor.u32 %v798, %v799
        %vm801 = vcmp.lt.s32.totalorder %v782, 1
        %vm802 = vcmp.lt.s32.totalorder %v782, 2
        %vm803 = vcmp.lt.s32.totalorder %v782, 3
        %vm804 = vcmp.lt.s32.totalorder %v782, 4
        %v805 = vsel %vm801, %v785, %v788
        %v806 = vsel %vm804, %v794, 2102212464
        %v807 = vsel %vm803, %v791, %v806
        %v808 = vsel %vm802, %v805, %v807
        %v809 = vsel %vm801, %v788, %v791
        %v810 = vsel %vm804, %v797, 920167782
        %v811 = vsel %vm803, %v794, %v810
        %v812 = vsel %vm802, %v809, %v811
        %v813 = vsel %vm801, %v791, %v794
        %v814 = vsel %vm804, %v800, 1326507024
        %v815 = vsel %vm803, %v797, %v814
        %v816 = vsel %vm802, %v813, %v815
        %v817 = vshll.u32 %v777, 8
        %v818 = vmul.u32.u64.compose %v817, %v816
        %v819 = vextract.low.u32 %v818
        %v820 = vextract.high.u32 %v818
        %v821 = vmul.u32.u64.compose %v817, %v812
        %v822 = vextract.low.u32 %v821
        %v823 = vextract.high.u32 %v821
        %v824 = vmul.u32 %v817, %v808
        %v825 = vadd.s32 %v820, %v822
        %vm826 = vc.u32 %v820, %v822
        %v827 = vadd.s32 %v823, 1
        %v828 = vsel %vm826, %v827, %v823
        %v829 = vadd.s32 %v824, %v828
        %v830 = vadd.s32 %v829, 536870912
        %v831 = vshrl.u32 %v830, 30
        %v832 = vshll.u32 %v831, 30
        %v833 = vsub.s32 %v829, %v832
        %vm834 = vcmp.lt.s32.totalorder %v833, 0
        %v835 = vsub.s32 0, %v833
        %v836 = vsel %vm834, %v835, %v833
        %v837 = vclz %v836
        %v838 = vsub.s32 %v837, 2
        %vm839 = vcmp.gt.s32.totalorder 0, %v838
        %v840 = vsel %vm839, 0, %v838
        %v841 = vsub.s32 32, %v840
        %v842 = vshll.u32 %v833, %v840
        %v843 = vshrl.u32 %v825, %v841
        %v844 = vor.u32 %v842, %v843
        %v845 = vsub.s32 4294967266, %v840
        %v846 = vadd.s32 %v845, 127
        %v847 = vshll.u32 %v846, 23
        %v848 = vor.u32 4788187, %v847
        %v849 = vand.u32 2147483647, %v848
        %v851 = vcvt.s32.f32 %v844
        %v852 = vmul.f32 %v851, %v849
        %v853 = vxor.u32 %v852, 2147483648
        %v854 = vsel %vm771, %v853, %v852
        %v855 = vsub.s32 4, %v831
        %v856 = vsel %vm771, %v855, %v831
        %v857 = vsel %vm770, %v535, %v854
        %v858 = vsel %vm770, 0, %v856
        %v859 = vcosq.f32.pop %v857
        %v860 = vsinq.f32.pop %v857
        %vm861 = vweird.f32 %v535
        %v862 = vand.u32 %v858, 3
        %vm863 = vcmp.lt.s32.totalorder %v862, 2
        %vm864 = vcmp.eq.s32.totalorder %v862, 0
        %v865 = vxor.u32 %v860, 2147483648
        %v866 = vsel %vm864, %v859, %v865
        %vm867 = vcmp.eq.s32.totalorder %v862, 2
        %v868 = vxor.u32 %v859, 2147483648
        %v869 = vsel %vm867, %v868, %v860
        %v870 = vsel %vm863, %v866, %v869
        %v871 = vsel %vm861, nan, %v870
        %v872 = vand.u32 2147483647, %v540
        %vm873 = vcmp.le.f32.partialorder %v872, 0.7853982
        %vm874 = vcmp.lt.s32.totalorder %v540, 0
        %v875 = vand.u32 %v540, 2139095040
        %v876 = vshrl.u32 %v875, 23
        %v877 = vsub.s32 %v876, 127
        %v878 = vand.u32 2147483647, %v540
        %v879 = vand.u32 %v878, 8388607
        %v880 = vor.u32 %v879, 8388608
        %v881 = vsub.s32 0, %v880
        %v882 = vadd.s32 %v877, 1
        %vm883 = vcmp.gt.s32.totalorder %v882, 0
        %v884 = vsel %vm883, %v882, 0
        %v885 = vshrl.u32 %v884, 5
        %v886 = vand.u32 %v884, 31
        %v887 = vsub.s32 32, %v886
        %v888 = vshrl.u32 683565275, %v887
        %v889 = vshll.u32 683565275, %v886
        %v890 = vshrl.u32 2475754826, %v887
        %v891 = vor.u32 %v889, %v890
        %v892 = vshll.u32 2475754826, %v886
        %v893 = vshrl.u32 2131351028, %v887
        %v894 = vor.u32 %v892, %v893
        %v895 = vshll.u32 2131351028, %v886
        %v896 = vshrl.u32 2102212464, %v887
        %v897 = vor.u32 %v895, %v896
        %v898 = vshll.u32 2102212464, %v886
        %v899 = vshrl.u32 920167782, %v887
        %v900 = vor.u32 %v898, %v899
        %v901 = vshll.u32 920167782, %v886
        %v902 = vshrl.u32 1326507024, %v887
        %v903 = vor.u32 %v901, %v902
        %vm904 = vcmp.lt.s32.totalorder %v885, 1
        %vm905 = vcmp.lt.s32.totalorder %v885, 2
        %vm906 = vcmp.lt.s32.totalorder %v885, 3
        %vm907 = vcmp.lt.s32.totalorder %v885, 4
        %v908 = vsel %vm904, %v888, %v891
        %v909 = vsel %vm907, %v897, 2102212464
        %v910 = vsel %vm906, %v894, %v909
        %v911 = vsel %vm905, %v908, %v910
        %v912 = vsel %vm904, %v891, %v894
        %v913 = vsel %vm907, %v900, 920167782
        %v914 = vsel %vm906, %v897, %v913
        %v915 = vsel %vm905, %v912, %v914
        %v916 = vsel %vm904, %v894, %v897
        %v917 = vsel %vm907, %v903, 1326507024
        %v918 = vsel %vm906, %v900, %v917
        %v919 = vsel %vm905, %v916, %v918
        %v920 = vshll.u32 %v880, 8
        %v921 = vmul.u32.u64.compose %v920, %v919
        %v922 = vextract.low.u32 %v921
        %v923 = vextract.high.u32 %v921
        %v924 = vmul.u32.u64.compose %v920, %v915
        %v925 = vextract.low.u32 %v924
        %v926 = vextract.high.u32 %v924
        %v927 = vmul.u32 %v920, %v911
        %v928 = vadd.s32 %v923, %v925
        %vm929 = vc.u32 %v923, %v925
        %v930 = vadd.s32 %v926, 1
        %v931 = vsel %vm929, %v930, %v926
        %v932 = vadd.s32 %v927, %v931
        %v933 = vadd.s32 %v932, 536870912
        %v934 = vshrl.u32 %v933, 30
        %v935 = vshll.u32 %v934, 30
        %v936 = vsub.s32 %v932, %v935
        %vm937 = vcmp.lt.s32.totalorder %v936, 0
        %v938 = vsub.s32 0, %v936
        %v939 = vsel %vm937, %v938, %v936
        %v940 = vclz %v939
        %v941 = vsub.s32 %v940, 2
        %vm942 = vcmp.gt.s32.totalorder 0, %v941
        %v943 = vsel %vm942, 0, %v941
        %v944 = vsub.s32 32, %v943
        %v945 = vshll.u32 %v936, %v943
        %v946 = vshrl.u32 %v928, %v944
        %v947 = vor.u32 %v945, %v946
        %v948 = vsub.s32 4294967266, %v943
        %v949 = vadd.s32 %v948, 127
        %v950 = vshll.u32 %v949, 23
        %v951 = vor.u32 4788187, %v950
        %v952 = vand.u32 2147483647, %v951
        %v954 = vcvt.s32.f32 %v947
        %v955 = vmul.f32 %v954, %v952
        %v956 = vxor.u32 %v955, 2147483648
        %v957 = vsel %vm874, %v956, %v955
        %v958 = vsub.s32 4, %v934
        %v959 = vsel %vm874, %v958, %v934
        %v960 = vsel %vm873, %v540, %v957
        %v961 = vsel %vm873, 0, %v959
        %v962 = vcosq.f32.pop %v960
        %v963 = vsinq.f32.pop %v960
        %vm964 = vweird.f32 %v540
        %v965 = vand.u32 %v961, 3
        %vm966 = vcmp.lt.s32.totalorder %v965, 2
        %vm967 = vcmp.eq.s32.totalorder %v965, 0
        %v968 = vxor.u32 %v963, 2147483648
        %v969 = vsel %vm967, %v962, %v968
        %vm970 = vcmp.eq.s32.totalorder %v965, 2
        %v971 = vxor.u32 %v962, 2147483648
        %v972 = vsel %vm970, %v971, %v963
        %v973 = vsel %vm966, %v969, %v972
        %v974 = vsel %vm964, nan, %v973
        %v975 = vand.u32 2147483647, %v545
        %vm976 = vcmp.le.f32.partialorder %v975, 0.7853982
        %vm977 = vcmp.lt.s32.totalorder %v545, 0
        %v978 = vand.u32 %v545, 2139095040
        %v979 = vshrl.u32 %v978, 23
        %v980 = vsub.s32 %v979, 127
        %v981 = vand.u32 2147483647, %v545
        %v982 = vand.u32 %v981, 8388607
        %v983 = vor.u32 %v982, 8388608
        %v984 = vsub.s32 0, %v983
        %v985 = vadd.s32 %v980, 1
        %vm986 = vcmp.gt.s32.totalorder %v985, 0
        %v987 = vsel %vm986, %v985, 0
        %v988 = vshrl.u32 %v987, 5
        %v989 = vand.u32 %v987, 31
        %v990 = vsub.s32 32, %v989
        %v991 = vshrl.u32 683565275, %v990
        %v992 = vshll.u32 683565275, %v989
        %v993 = vshrl.u32 2475754826, %v990
        %v994 = vor.u32 %v992, %v993
        %v995 = vshll.u32 2475754826, %v989
        %v996 = vshrl.u32 2131351028, %v990
        %v997 = vor.u32 %v995, %v996
        %v998 = vshll.u32 2131351028, %v989
        %v999 = vshrl.u32 2102212464, %v990
        %v1000 = vor.u32 %v998, %v999
        %v1001 = vshll.u32 2102212464, %v989
        %v1002 = vshrl.u32 920167782, %v990
        %v1003 = vor.u32 %v1001, %v1002
        %v1004 = vshll.u32 920167782, %v989
        %v1005 = vshrl.u32 1326507024, %v990
        %v1006 = vor.u32 %v1004, %v1005
        %vm1007 = vcmp.lt.s32.totalorder %v988, 1
        %vm1008 = vcmp.lt.s32.totalorder %v988, 2
        %vm1009 = vcmp.lt.s32.totalorder %v988, 3
        %vm1010 = vcmp.lt.s32.totalorder %v988, 4
        %v1011 = vsel %vm1007, %v991, %v994
        %v1012 = vsel %vm1010, %v1000, 2102212464
        %v1013 = vsel %vm1009, %v997, %v1012
        %v1014 = vsel %vm1008, %v1011, %v1013
        %v1015 = vsel %vm1007, %v994, %v997
        %v1016 = vsel %vm1010, %v1003, 920167782
        %v1017 = vsel %vm1009, %v1000, %v1016
        %v1018 = vsel %vm1008, %v1015, %v1017
        %v1019 = vsel %vm1007, %v997, %v1000
        %v1020 = vsel %vm1010, %v1006, 1326507024
        %v1021 = vsel %vm1009, %v1003, %v1020
        %v1022 = vsel %vm1008, %v1019, %v1021
        %v1023 = vshll.u32 %v983, 8
        %v1024 = vmul.u32.u64.compose %v1023, %v1022
        %v1025 = vextract.low.u32 %v1024
        %v1026 = vextract.high.u32 %v1024
        %v1027 = vmul.u32.u64.compose %v1023, %v1018
        %v1028 = vextract.low.u32 %v1027
        %v1029 = vextract.high.u32 %v1027
        %v1030 = vmul.u32 %v1023, %v1014
        %v1031 = vadd.s32 %v1026, %v1028
        %vm1032 = vc.u32 %v1026, %v1028
        %v1033 = vadd.s32 %v1029, 1
        %v1034 = vsel %vm1032, %v1033, %v1029
        %v1035 = vadd.s32 %v1030, %v1034
        %v1036 = vadd.s32 %v1035, 536870912
        %v1037 = vshrl.u32 %v1036, 30
        %v1038 = vshll.u32 %v1037, 30
        %v1039 = vsub.s32 %v1035, %v1038
        %vm1040 = vcmp.lt.s32.totalorder %v1039, 0
        %v1041 = vsub.s32 0, %v1039
        %v1042 = vsel %vm1040, %v1041, %v1039
        %v1043 = vclz %v1042
        %v1044 = vsub.s32 %v1043, 2
        %vm1045 = vcmp.gt.s32.totalorder 0, %v1044
        %v1046 = vsel %vm1045, 0, %v1044
        %v1047 = vsub.s32 32, %v1046
        %v1048 = vshll.u32 %v1039, %v1046
        %v1049 = vshrl.u32 %v1031, %v1047
        %v1050 = vor.u32 %v1048, %v1049
        %v1051 = vsub.s32 4294967266, %v1046
        %v1052 = vadd.s32 %v1051, 127
        %v1053 = vshll.u32 %v1052, 23
        %v1054 = vor.u32 4788187, %v1053
        %v1055 = vand.u32 2147483647, %v1054
        %v1057 = vcvt.s32.f32 %v1050
        %v1058 = vmul.f32 %v1057, %v1055
        %v1059 = vxor.u32 %v1058, 2147483648
        %v1060 = vsel %vm977, %v1059, %v1058
        %v1061 = vsub.s32 4, %v1037
        %v1062 = vsel %vm977, %v1061, %v1037
        %v1063 = vsel %vm976, %v545, %v1060
        %v1064 = vsel %vm976, 0, %v1062
        %v1065 = vcosq.f32.pop %v1063
        %v1066 = vsinq.f32.pop %v1063
        %vm1067 = vweird.f32 %v545
        %v1068 = vand.u32 %v1064, 3
        %vm1069 = vcmp.lt.s32.totalorder %v1068, 2
        %vm1070 = vcmp.eq.s32.totalorder %v1068, 0
        %v1071 = vxor.u32 %v1066, 2147483648
        %v1072 = vsel %vm1070, %v1065, %v1071
        %vm1073 = vcmp.eq.s32.totalorder %v1068, 2
        %v1074 = vxor.u32 %v1065, 2147483648
        %v1075 = vsel %vm1073, %v1074, %v1066
        %v1076 = vsel %vm1069, %v1072, %v1075
        %v1077 = vsel %vm1067, nan, %v1076
        %v1078 = vand.u32 2147483647, %v550
        %vm1079 = vcmp.le.f32.partialorder %v1078, 0.7853982
        %vm1080 = vcmp.lt.s32.totalorder %v550, 0
        %v1081 = vand.u32 %v550, 2139095040
        %v1082 = vshrl.u32 %v1081, 23
        %v1083 = vsub.s32 %v1082, 127
        %v1084 = vand.u32 2147483647, %v550
        %v1085 = vand.u32 %v1084, 8388607
        %v1086 = vor.u32 %v1085, 8388608
        %v1087 = vsub.s32 0, %v1086
        %v1088 = vadd.s32 %v1083, 1
        %vm1089 = vcmp.gt.s32.totalorder %v1088, 0
        %v1090 = vsel %vm1089, %v1088, 0
        %v1091 = vshrl.u32 %v1090, 5
        %v1092 = vand.u32 %v1090, 31
        %v1093 = vsub.s32 32, %v1092
        %v1094 = vshrl.u32 683565275, %v1093
        %v1095 = vshll.u32 683565275, %v1092
        %v1096 = vshrl.u32 2475754826, %v1093
        %v1097 = vor.u32 %v1095, %v1096
        %v1098 = vshll.u32 2475754826, %v1092
        %v1099 = vshrl.u32 2131351028, %v1093
        %v1100 = vor.u32 %v1098, %v1099
        %v1101 = vshll.u32 2131351028, %v1092
        %v1102 = vshrl.u32 2102212464, %v1093
        %v1103 = vor.u32 %v1101, %v1102
        %v1104 = vshll.u32 2102212464, %v1092
        %v1105 = vshrl.u32 920167782, %v1093
        %v1106 = vor.u32 %v1104, %v1105
        %v1107 = vshll.u32 920167782, %v1092
        %v1108 = vshrl.u32 1326507024, %v1093
        %v1109 = vor.u32 %v1107, %v1108
        %vm1110 = vcmp.lt.s32.totalorder %v1091, 1
        %vm1111 = vcmp.lt.s32.totalorder %v1091, 2
        %vm1112 = vcmp.lt.s32.totalorder %v1091, 3
        %vm1113 = vcmp.lt.s32.totalorder %v1091, 4
        %v1114 = vsel %vm1110, %v1094, %v1097
        %v1115 = vsel %vm1113, %v1103, 2102212464
        %v1116 = vsel %vm1112, %v1100, %v1115
        %v1117 = vsel %vm1111, %v1114, %v1116
        %v1118 = vsel %vm1110, %v1097, %v1100
        %v1119 = vsel %vm1113, %v1106, 920167782
        %v1120 = vsel %vm1112, %v1103, %v1119
        %v1121 = vsel %vm1111, %v1118, %v1120
        %v1122 = vsel %vm1110, %v1100, %v1103
        %v1123 = vsel %vm1113, %v1109, 1326507024
        %v1124 = vsel %vm1112, %v1106, %v1123
        %v1125 = vsel %vm1111, %v1122, %v1124
        %v1126 = vshll.u32 %v1086, 8
        %v1127 = vmul.u32.u64.compose %v1126, %v1125
        %v1128 = vextract.low.u32 %v1127
        %v1129 = vextract.high.u32 %v1127
        %v1130 = vmul.u32.u64.compose %v1126, %v1121
        %v1131 = vextract.low.u32 %v1130
        %v1132 = vextract.high.u32 %v1130
        %v1133 = vmul.u32 %v1126, %v1117
        %v1134 = vadd.s32 %v1129, %v1131
        %vm1135 = vc.u32 %v1129, %v1131
        %v1136 = vadd.s32 %v1132, 1
        %v1137 = vsel %vm1135, %v1136, %v1132
        %v1138 = vadd.s32 %v1133, %v1137
        %v1139 = vadd.s32 %v1138, 536870912
        %v1140 = vshrl.u32 %v1139, 30
        %v1141 = vshll.u32 %v1140, 30
        %v1142 = vsub.s32 %v1138, %v1141
        %vm1143 = vcmp.lt.s32.totalorder %v1142, 0
        %v1144 = vsub.s32 0, %v1142
        %v1145 = vsel %vm1143, %v1144, %v1142
        %v1146 = vclz %v1145
        %v1147 = vsub.s32 %v1146, 2
        %vm1148 = vcmp.gt.s32.totalorder 0, %v1147
        %v1149 = vsel %vm1148, 0, %v1147
        %v1150 = vsub.s32 32, %v1149
        %v1151 = vshll.u32 %v1142, %v1149
        %v1152 = vshrl.u32 %v1134, %v1150
        %v1153 = vor.u32 %v1151, %v1152
        %v1154 = vsub.s32 4294967266, %v1149
        %v1155 = vadd.s32 %v1154, 127
        %v1156 = vshll.u32 %v1155, 23
        %v1157 = vor.u32 4788187, %v1156
        %v1158 = vand.u32 2147483647, %v1157
        %v1160 = vcvt.s32.f32 %v1153
        %v1161 = vmul.f32 %v1160, %v1158
        %v1162 = vxor.u32 %v1161, 2147483648
        %v1163 = vsel %vm1080, %v1162, %v1161
        %v1164 = vsub.s32 4, %v1140
        %v1165 = vsel %vm1080, %v1164, %v1140
        %v1166 = vsel %vm1079, %v550, %v1163
        %v1167 = vsel %vm1079, 0, %v1165
        %v1168 = vcosq.f32.pop %v1166
        %v1169 = vsinq.f32.pop %v1166
        %vm1170 = vweird.f32 %v550
        %v1171 = vand.u32 %v1167, 3
        %vm1172 = vcmp.lt.s32.totalorder %v1171, 2
        %vm1173 = vcmp.eq.s32.totalorder %v1171, 0
        %v1174 = vxor.u32 %v1169, 2147483648
        %v1175 = vsel %vm1173, %v1168, %v1174
        %vm1176 = vcmp.eq.s32.totalorder %v1171, 2
        %v1177 = vxor.u32 %v1168, 2147483648
        %v1178 = vsel %vm1176, %v1177, %v1169
        %v1179 = vsel %vm1172, %v1175, %v1178
        %v1180 = vsel %vm1170, nan, %v1179
        %v1181 = vand.u32 2147483647, %v555
        %vm1182 = vcmp.le.f32.partialorder %v1181, 0.7853982
        %vm1183 = vcmp.lt.s32.totalorder %v555, 0
        %v1184 = vand.u32 %v555, 2139095040
        %v1185 = vshrl.u32 %v1184, 23
        %v1186 = vsub.s32 %v1185, 127
        %v1187 = vand.u32 2147483647, %v555
        %v1188 = vand.u32 %v1187, 8388607
        %v1189 = vor.u32 %v1188, 8388608
        %v1190 = vsub.s32 0, %v1189
        %v1191 = vadd.s32 %v1186, 1
        %vm1192 = vcmp.gt.s32.totalorder %v1191, 0
        %v1193 = vsel %vm1192, %v1191, 0
        %v1194 = vshrl.u32 %v1193, 5
        %v1195 = vand.u32 %v1193, 31
        %v1196 = vsub.s32 32, %v1195
        %v1197 = vshrl.u32 683565275, %v1196
        %v1198 = vshll.u32 683565275, %v1195
        %v1199 = vshrl.u32 2475754826, %v1196
        %v1200 = vor.u32 %v1198, %v1199
        %v1201 = vshll.u32 2475754826, %v1195
        %v1202 = vshrl.u32 2131351028, %v1196
        %v1203 = vor.u32 %v1201, %v1202
        %v1204 = vshll.u32 2131351028, %v1195
        %v1205 = vshrl.u32 2102212464, %v1196
        %v1206 = vor.u32 %v1204, %v1205
        %v1207 = vshll.u32 2102212464, %v1195
        %v1208 = vshrl.u32 920167782, %v1196
        %v1209 = vor.u32 %v1207, %v1208
        %v1210 = vshll.u32 920167782, %v1195
        %v1211 = vshrl.u32 1326507024, %v1196
        %v1212 = vor.u32 %v1210, %v1211
        %vm1213 = vcmp.lt.s32.totalorder %v1194, 1
        %vm1214 = vcmp.lt.s32.totalorder %v1194, 2
        %vm1215 = vcmp.lt.s32.totalorder %v1194, 3
        %vm1216 = vcmp.lt.s32.totalorder %v1194, 4
        %v1217 = vsel %vm1213, %v1197, %v1200
        %v1218 = vsel %vm1216, %v1206, 2102212464
        %v1219 = vsel %vm1215, %v1203, %v1218
        %v1220 = vsel %vm1214, %v1217, %v1219
        %v1221 = vsel %vm1213, %v1200, %v1203
        %v1222 = vsel %vm1216, %v1209, 920167782
        %v1223 = vsel %vm1215, %v1206, %v1222
        %v1224 = vsel %vm1214, %v1221, %v1223
        %v1225 = vsel %vm1213, %v1203, %v1206
        %v1226 = vsel %vm1216, %v1212, 1326507024
        %v1227 = vsel %vm1215, %v1209, %v1226
        %v1228 = vsel %vm1214, %v1225, %v1227
        %v1229 = vshll.u32 %v1189, 8
        %v1230 = vmul.u32.u64.compose %v1229, %v1228
        %v1231 = vextract.low.u32 %v1230
        %v1232 = vextract.high.u32 %v1230
        %v1233 = vmul.u32.u64.compose %v1229, %v1224
        %v1234 = vextract.low.u32 %v1233
        %v1235 = vextract.high.u32 %v1233
        %v1236 = vmul.u32 %v1229, %v1220
        %v1237 = vadd.s32 %v1232, %v1234
        %vm1238 = vc.u32 %v1232, %v1234
        %v1239 = vadd.s32 %v1235, 1
        %v1240 = vsel %vm1238, %v1239, %v1235
        %v1241 = vadd.s32 %v1236, %v1240
        %v1242 = vadd.s32 %v1241, 536870912
        %v1243 = vshrl.u32 %v1242, 30
        %v1244 = vshll.u32 %v1243, 30
        %v1245 = vsub.s32 %v1241, %v1244
        %vm1246 = vcmp.lt.s32.totalorder %v1245, 0
        %v1247 = vsub.s32 0, %v1245
        %v1248 = vsel %vm1246, %v1247, %v1245
        %v1249 = vclz %v1248
        %v1250 = vsub.s32 %v1249, 2
        %vm1251 = vcmp.gt.s32.totalorder 0, %v1250
        %v1252 = vsel %vm1251, 0, %v1250
        %v1253 = vsub.s32 32, %v1252
        %v1254 = vshll.u32 %v1245, %v1252
        %v1255 = vshrl.u32 %v1237, %v1253
        %v1256 = vor.u32 %v1254, %v1255
        %v1257 = vsub.s32 4294967266, %v1252
        %v1258 = vadd.s32 %v1257, 127
        %v1259 = vshll.u32 %v1258, 23
        %v1260 = vor.u32 4788187, %v1259
        %v1261 = vand.u32 2147483647, %v1260
        %v1263 = vcvt.s32.f32 %v1256
        %v1264 = vmul.f32 %v1263, %v1261
        %v1265 = vxor.u32 %v1264, 2147483648
        %v1266 = vsel %vm1183, %v1265, %v1264
        %v1267 = vsub.s32 4, %v1243
        %v1268 = vsel %vm1183, %v1267, %v1243
        %v1269 = vsel %vm1182, %v555, %v1266
        %v1270 = vsel %vm1182, 0, %v1268
        %v1271 = vcosq.f32.pop %v1269
        %v1272 = vsinq.f32.pop %v1269
        %vm1273 = vweird.f32 %v555
        %v1274 = vand.u32 %v1270, 3
        %vm1275 = vcmp.lt.s32.totalorder %v1274, 2
        %vm1276 = vcmp.eq.s32.totalorder %v1274, 0
        %v1277 = vxor.u32 %v1272, 2147483648
        %v1278 = vsel %vm1276, %v1271, %v1277
        %vm1279 = vcmp.eq.s32.totalorder %v1274, 2
        %v1280 = vxor.u32 %v1271, 2147483648
        %v1281 = vsel %vm1279, %v1280, %v1272
        %v1282 = vsel %vm1275, %v1278, %v1281
        %v1283 = vsel %vm1273, nan, %v1282
        %v1284 = vand.u32 2147483647, %v560
        %vm1285 = vcmp.le.f32.partialorder %v1284, 0.7853982
        %vm1286 = vcmp.lt.s32.totalorder %v560, 0
        %v1287 = vand.u32 %v560, 2139095040
        %v1288 = vshrl.u32 %v1287, 23
        %v1289 = vsub.s32 %v1288, 127
        %v1290 = vand.u32 2147483647, %v560
        %v1291 = vand.u32 %v1290, 8388607
        %v1292 = vor.u32 %v1291, 8388608
        %v1293 = vsub.s32 0, %v1292
        %v1294 = vadd.s32 %v1289, 1
        %vm1295 = vcmp.gt.s32.totalorder %v1294, 0
        %v1296 = vsel %vm1295, %v1294, 0
        %v1297 = vshrl.u32 %v1296, 5
        %v1298 = vand.u32 %v1296, 31
        %v1299 = vsub.s32 32, %v1298
        %v1300 = vshrl.u32 683565275, %v1299
        %v1301 = vshll.u32 683565275, %v1298
        %v1302 = vshrl.u32 2475754826, %v1299
        %v1303 = vor.u32 %v1301, %v1302
        %v1304 = vshll.u32 2475754826, %v1298
        %v1305 = vshrl.u32 2131351028, %v1299
        %v1306 = vor.u32 %v1304, %v1305
        %v1307 = vshll.u32 2131351028, %v1298
        %v1308 = vshrl.u32 2102212464, %v1299
        %v1309 = vor.u32 %v1307, %v1308
        %v1310 = vshll.u32 2102212464, %v1298
        %v1311 = vshrl.u32 920167782, %v1299
        %v1312 = vor.u32 %v1310, %v1311
        %v1313 = vshll.u32 920167782, %v1298
        %v1314 = vshrl.u32 1326507024, %v1299
        %v1315 = vor.u32 %v1313, %v1314
        %vm1316 = vcmp.lt.s32.totalorder %v1297, 1
        %vm1317 = vcmp.lt.s32.totalorder %v1297, 2
        %vm1318 = vcmp.lt.s32.totalorder %v1297, 3
        %vm1319 = vcmp.lt.s32.totalorder %v1297, 4
        %v1320 = vsel %vm1316, %v1300, %v1303
        %v1321 = vsel %vm1319, %v1309, 2102212464
        %v1322 = vsel %vm1318, %v1306, %v1321
        %v1323 = vsel %vm1317, %v1320, %v1322
        %v1324 = vsel %vm1316, %v1303, %v1306
        %v1325 = vsel %vm1319, %v1312, 920167782
        %v1326 = vsel %vm1318, %v1309, %v1325
        %v1327 = vsel %vm1317, %v1324, %v1326
        %v1328 = vsel %vm1316, %v1306, %v1309
        %v1329 = vsel %vm1319, %v1315, 1326507024
        %v1330 = vsel %vm1318, %v1312, %v1329
        %v1331 = vsel %vm1317, %v1328, %v1330
        %v1332 = vshll.u32 %v1292, 8
        %v1333 = vmul.u32.u64.compose %v1332, %v1331
        %v1334 = vextract.low.u32 %v1333
        %v1335 = vextract.high.u32 %v1333
        %v1336 = vmul.u32.u64.compose %v1332, %v1327
        %v1337 = vextract.low.u32 %v1336
        %v1338 = vextract.high.u32 %v1336
        %v1339 = vmul.u32 %v1332, %v1323
        %v1340 = vadd.s32 %v1335, %v1337
        %vm1341 = vc.u32 %v1335, %v1337
        %v1342 = vadd.s32 %v1338, 1
        %v1343 = vsel %vm1341, %v1342, %v1338
        %v1344 = vadd.s32 %v1339, %v1343
        %v1345 = vadd.s32 %v1344, 536870912
        %v1346 = vshrl.u32 %v1345, 30
        %v1347 = vshll.u32 %v1346, 30
        %v1348 = vsub.s32 %v1344, %v1347
        %vm1349 = vcmp.lt.s32.totalorder %v1348, 0
        %v1350 = vsub.s32 0, %v1348
        %v1351 = vsel %vm1349, %v1350, %v1348
        %v1352 = vclz %v1351
        %v1353 = vsub.s32 %v1352, 2
        %vm1354 = vcmp.gt.s32.totalorder 0, %v1353
        %v1355 = vsel %vm1354, 0, %v1353
        %v1356 = vsub.s32 32, %v1355
        %v1357 = vshll.u32 %v1348, %v1355
        %v1358 = vshrl.u32 %v1340, %v1356
        %v1359 = vor.u32 %v1357, %v1358
        %v1360 = vsub.s32 4294967266, %v1355
        %v1361 = vadd.s32 %v1360, 127
        %v1362 = vshll.u32 %v1361, 23
        %v1363 = vor.u32 4788187, %v1362
        %v1364 = vand.u32 2147483647, %v1363
        %v1366 = vcvt.s32.f32 %v1359
        %v1367 = vmul.f32 %v1366, %v1364
        %v1368 = vxor.u32 %v1367, 2147483648
        %v1369 = vsel %vm1286, %v1368, %v1367
        %v1370 = vsub.s32 4, %v1346
        %v1371 = vsel %vm1286, %v1370, %v1346
        %v1372 = vsel %vm1285, %v560, %v1369
        %v1373 = vsel %vm1285, 0, %v1371
        %v1374 = vcosq.f32.pop %v1372
        %v1375 = vsinq.f32.pop %v1372
        %vm1376 = vweird.f32 %v560
        %v1377 = vand.u32 %v1373, 3
        %vm1378 = vcmp.lt.s32.totalorder %v1377, 2
        %vm1379 = vcmp.eq.s32.totalorder %v1377, 0
        %v1380 = vxor.u32 %v1375, 2147483648
        %v1381 = vsel %vm1379, %v1374, %v1380
        %vm1382 = vcmp.eq.s32.totalorder %v1377, 2
        %v1383 = vxor.u32 %v1374, 2147483648
        %v1384 = vsel %vm1382, %v1383, %v1375
        %v1385 = vsel %vm1378, %v1381, %v1384
        %v1386 = vsel %vm1376, nan, %v1385
        %v1387 = vld [vmem:[%s329] sm:$0xff]
        %v1388 = vld [vmem:[%s329 + $0x8] sm:$0xff]
        %v1389 = vld [vmem:[%s329 + $0x10] sm:$0xff]
        %v1390 = vld [vmem:[%s329 + $0x18] sm:$0xff]
        %v1391 = vld [vmem:[%s329 + $0x20] sm:$0xff]
        %v1392 = vld [vmem:[%s329 + $0x28] sm:$0xff]
        %v1393 = vld [vmem:[%s329 + $0x30] sm:$0xff]
        %v1394 = vld [vmem:[%s329 + $0x38] sm:$0xff]
        %v1395 = vld [vmem:[%s329 + $0x40] sm:$0xff]
        %v1396 = vld [vmem:[%s329 + $0x48] sm:$0xff]
        %v1397 = vld [vmem:[%s329 + $0x50] sm:$0xff]
        %v1398 = vld [vmem:[%s329 + $0x58] sm:$0xff]
        %v1399 = vld [vmem:[%s329 + $0x60] sm:$0xff]
        %v1400 = vld [vmem:[%s329 + $0x68] sm:$0xff]
        %v1401 = vld [vmem:[%s329 + $0x70] sm:$0xff]
        %v1402 = vld [vmem:[%s329 + $0x78] sm:$0xff]
        %v1403 = vld [vmem:[%s400] sm:$0x1]
        %v1405 = vlaneseq
        %v1406 = vshrl.u32 %v1405, 7
        %v1407 = vsub.s32 0, %v1406
        %v1408 = vrot.slane %v1403, %v1407
        %1410 = vmatprep.subr.mxu0 0.0
        %1411 = vmatpush1.msra.mxu0 %v1387
        %1412 = vmatprep.subr.mxu0 0.0
        %1413 = vmatpush1.msra.mxu0 %v1388
        %1414 = vmatprep.subr.mxu0 0.0
        %1415 = vmatpush1.msra.mxu0 %v1389
        %1416 = vmatprep.subr.mxu0 0.0
        %1417 = vmatpush1.msra.mxu0 %v1390
        %1418 = vmatprep.subr.mxu0 0.0
        %1419 = vmatpush1.msra.mxu0 %v1391
        %1420 = vmatprep.subr.mxu0 0.0
        %1421 = vmatpush1.msra.mxu0 %v1392
        %1422 = vmatprep.subr.mxu0 0.0
        %1423 = vmatpush1.msra.mxu0 %v1393
        %1424 = vmatprep.subr.mxu0 0.0
        %1425 = vmatpush1.msra.mxu0 %v1394
        %1426 = vmatprep.subr.mxu0 0.0
        %1427 = vmatpush1.msra.mxu0 %v1395
        %1428 = vmatprep.subr.mxu0 0.0
        %1429 = vmatpush1.msra.mxu0 %v1396
        %1430 = vmatprep.subr.mxu0 0.0
        %1431 = vmatpush1.msra.mxu0 %v1397
        %1432 = vmatprep.subr.mxu0 0.0
        %1433 = vmatpush1.msra.mxu0 %v1398
        %1434 = vmatprep.subr.mxu0 0.0
        %1435 = vmatpush1.msra.mxu0 %v1399
        %1436 = vmatprep.subr.mxu0 0.0
        %1437 = vmatpush1.msra.mxu0 %v1400
        %1438 = vmatprep.subr.mxu0 0.0
        %1439 = vmatpush1.msra.mxu0 %v1401
        %1440 = vmatprep.subr.mxu0 0.0
        %1441 = vmatpush1.msra.mxu0 %v1402
        %1442 = vmatprep.subr.mxu0 0.0
        %1443 = vmatpush1.msra.mxu0 0.0
        %1444 = vmatprep.subr.mxu0 0.0
        %1445 = vmatpush1.msra.mxu0 0.0
        %1446 = vmatprep.subr.mxu0 0.0
        %1447 = vmatpush1.msra.mxu0 0.0
        %1448 = vmatprep.subr.mxu0 0.0
        %1449 = vmatpush1.msra.mxu0 0.0
        %1450 = vmatprep.subr.mxu0 0.0
        %1451 = vmatpush1.msra.mxu0 0.0
        %1452 = vmatprep.subr.mxu0 0.0
        %1453 = vmatpush1.msra.mxu0 0.0
        %1454 = vmatprep.subr.mxu0 0.0
        %1455 = vmatpush1.msra.mxu0 0.0
        %1456 = vmatprep.subr.mxu0 0.0
        %1457 = vmatpush1.msra.mxu0 0.0
        %1458 = vmatprep.subr.mxu0 0.0
        %1459 = vmatpush1.msra.mxu0 0.0
        %1460 = vmatprep.subr.mxu0 0.0
        %1461 = vmatpush1.msra.mxu0 0.0
        %1462 = vmatprep.subr.mxu0 0.0
        %1463 = vmatpush1.msra.mxu0 0.0
        %1464 = vmatprep.subr.mxu0 0.0
        %1465 = vmatpush1.msra.mxu0 0.0
        %1466 = vmatprep.subr.mxu0 0.0
        %1467 = vmatpush1.msra.mxu0 0.0
        %1468 = vmatprep.subr.mxu0 0.0
        %1469 = vmatpush1.msra.mxu0 0.0
        %1470 = vmatprep.subr.mxu0 0.0
        %1471 = vmatpush1.msra.mxu0 0.0
        %1472 = vmatprep.subr.mxu0 0.0
        %1473 = vmatpush1.msra.mxu0 0.0
        %1474 = vmatprep.mubr.f32.mxu0 0.0
        %1475 = vmatmul.mubr.f32.gmra.mrb[0].mxu0 %v665
        %v1476 = vpop.f32.mrb[0].mxu0
        %v1477 = vadd.f32 %v1408, %v1476
        %v1478 = vpop.f32.mrb[0].mxu0
        %1479 = vmatprep.mubr.f32.mxu0 0.0
        %1480 = vmatmul.mubr.f32.gmra.mrb[0].mxu0 %v768
        %v1481 = vpop.f32.mrb[0].mxu0
        %v1482 = vadd.f32 %v1408, %v1481
        %v1483 = vpop.f32.mrb[0].mxu0
        %1484 = vmatprep.mubr.f32.mxu0 0.0
        %1485 = vmatmul.mubr.f32.gmra.mrb[0].mxu0 %v871
        %v1486 = vpop.f32.mrb[0].mxu0
        %v1487 = vadd.f32 %v1408, %v1486
        %v1488 = vpop.f32.mrb[0].mxu0
        %1489 = vmatprep.mubr.f32.mxu0 0.0
        %1490 = vmatmul.mubr.f32.gmra.mrb[0].mxu0 %v974
        %v1491 = vpop.f32.mrb[0].mxu0
        %v1492 = vadd.f32 %v1408, %v1491
        %v1493 = vpop.f32.mrb[0].mxu0
        %1494 = vmatprep.mubr.f32.mxu0 0.0
        %1495 = vmatmul.mubr.f32.gmra.mrb[0].mxu0 %v1077
        %v1496 = vpop.f32.mrb[0].mxu0
        %v1497 = vadd.f32 %v1408, %v1496
        %v1498 = vpop.f32.mrb[0].mxu0
        %1499 = vmatprep.mubr.f32.mxu0 0.0
        %1500 = vmatmul.mubr.f32.gmra.mrb[0].mxu0 %v1180
        %v1501 = vpop.f32.mrb[0].mxu0
        %v1502 = vadd.f32 %v1408, %v1501
        %v1503 = vpop.f32.mrb[0].mxu0
        %1504 = vmatprep.mubr.f32.mxu0 0.0
        %1505 = vmatmul.mubr.f32.gmra.mrb[0].mxu0 %v1283
        %v1506 = vpop.f32.mrb[0].mxu0
        %v1507 = vadd.f32 %v1408, %v1506
        %v1508 = vpop.f32.mrb[0].mxu0
        %1509 = vmatprep.mubr.f32.mxu0 0.0
        %1510 = vmatmul.mubr.f32.gmra.mrb[0].mxu0 %v1386
        %v1511 = vpop.f32.mrb[0].mxu0
        %v1512 = vadd.f32 %v1408, %v1511
        %v1513 = vpop.f32.mrb[0].mxu0
        %1514 = vdwg.mxu0
        %v1515 = vand.u32 2147483647, %v1477
        %vm1516 = vcmp.le.f32.partialorder %v1515, 0.7853982
        %vm1517 = vcmp.lt.s32.totalorder %v1477, 0
        %v1518 = vand.u32 %v1477, 2139095040
        %v1519 = vshrl.u32 %v1518, 23
        %v1520 = vsub.s32 %v1519, 127
        %v1521 = vand.u32 2147483647, %v1477
        %v1522 = vand.u32 %v1521, 8388607
        %v1523 = vor.u32 %v1522, 8388608
        %v1524 = vsub.s32 0, %v1523
        %v1525 = vadd.s32 %v1520, 1
        %vm1526 = vcmp.gt.s32.totalorder %v1525, 0
        %v1527 = vsel %vm1526, %v1525, 0
        %v1528 = vshrl.u32 %v1527, 5
        %v1529 = vand.u32 %v1527, 31
        %v1530 = vsub.s32 32, %v1529
        %v1531 = vshrl.u32 683565275, %v1530
        %v1532 = vshll.u32 683565275, %v1529
        %v1533 = vshrl.u32 2475754826, %v1530
        %v1534 = vor.u32 %v1532, %v1533
        %v1535 = vshll.u32 2475754826, %v1529
        %v1536 = vshrl.u32 2131351028, %v1530
        %v1537 = vor.u32 %v1535, %v1536
        %v1538 = vshll.u32 2131351028, %v1529
        %v1539 = vshrl.u32 2102212464, %v1530
        %v1540 = vor.u32 %v1538, %v1539
        %v1541 = vshll.u32 2102212464, %v1529
        %v1542 = vshrl.u32 920167782, %v1530
        %v1543 = vor.u32 %v1541, %v1542
        %v1544 = vshll.u32 920167782, %v1529
        %v1545 = vshrl.u32 1326507024, %v1530
        %v1546 = vor.u32 %v1544, %v1545
        %vm1547 = vcmp.lt.s32.totalorder %v1528, 1
        %vm1548 = vcmp.lt.s32.totalorder %v1528, 2
        %vm1549 = vcmp.lt.s32.totalorder %v1528, 3
        %vm1550 = vcmp.lt.s32.totalorder %v1528, 4
        %v1551 = vsel %vm1547, %v1531, %v1534
        %v1552 = vsel %vm1550, %v1540, 2102212464
        %v1553 = vsel %vm1549, %v1537, %v1552
        %v1554 = vsel %vm1548, %v1551, %v1553
        %v1555 = vsel %vm1547, %v1534, %v1537
        %v1556 = vsel %vm1550, %v1543, 920167782
        %v1557 = vsel %vm1549, %v1540, %v1556
        %v1558 = vsel %vm1548, %v1555, %v1557
        %v1559 = vsel %vm1547, %v1537, %v1540
        %v1560 = vsel %vm1550, %v1546, 1326507024
        %v1561 = vsel %vm1549, %v1543, %v1560
        %v1562 = vsel %vm1548, %v1559, %v1561
        %v1563 = vshll.u32 %v1523, 8
        %v1564 = vmul.u32.u64.compose %v1563, %v1562
        %v1565 = vextract.low.u32 %v1564
        %v1566 = vextract.high.u32 %v1564
        %v1567 = vmul.u32.u64.compose %v1563, %v1558
        %v1568 = vextract.low.u32 %v1567
        %v1569 = vextract.high.u32 %v1567
        %v1570 = vmul.u32 %v1563, %v1554
        %v1571 = vadd.s32 %v1566, %v1568
        %vm1572 = vc.u32 %v1566, %v1568
        %v1573 = vadd.s32 %v1569, 1
        %v1574 = vsel %vm1572, %v1573, %v1569
        %v1575 = vadd.s32 %v1570, %v1574
        %v1576 = vadd.s32 %v1575, 536870912
        %v1577 = vshrl.u32 %v1576, 30
        %v1578 = vshll.u32 %v1577, 30
        %v1579 = vsub.s32 %v1575, %v1578
        %vm1580 = vcmp.lt.s32.totalorder %v1579, 0
        %v1581 = vsub.s32 0, %v1579
        %v1582 = vsel %vm1580, %v1581, %v1579
        %v1583 = vclz %v1582
        %v1584 = vsub.s32 %v1583, 2
        %vm1585 = vcmp.gt.s32.totalorder 0, %v1584
        %v1586 = vsel %vm1585, 0, %v1584
        %v1587 = vsub.s32 32, %v1586
        %v1588 = vshll.u32 %v1579, %v1586
        %v1589 = vshrl.u32 %v1571, %v1587
        %v1590 = vor.u32 %v1588, %v1589
        %v1591 = vsub.s32 4294967266, %v1586
        %v1592 = vadd.s32 %v1591, 127
        %v1593 = vshll.u32 %v1592, 23
        %v1594 = vor.u32 4788187, %v1593
        %v1595 = vand.u32 2147483647, %v1594
        %v1597 = vcvt.s32.f32 %v1590
        %v1598 = vmul.f32 %v1597, %v1595
        %v1599 = vxor.u32 %v1598, 2147483648
        %v1600 = vsel %vm1517, %v1599, %v1598
        %v1601 = vsub.s32 4, %v1577
        %v1602 = vsel %vm1517, %v1601, %v1577
        %v1603 = vsel %vm1516, %v1477, %v1600
        %v1604 = vsel %vm1516, 0, %v1602
        %v1605 = vcosq.f32.pop %v1603
        %v1606 = vsinq.f32.pop %v1603
        %vm1607 = vweird.f32 %v1477
        %v1608 = vand.u32 %v1604, 3
        %vm1609 = vcmp.lt.s32.totalorder %v1608, 2
        %vm1610 = vcmp.eq.s32.totalorder %v1608, 0
        %v1611 = vxor.u32 %v1606, 2147483648
        %v1612 = vsel %vm1610, %v1605, %v1611
        %vm1613 = vcmp.eq.s32.totalorder %v1608, 2
        %v1614 = vxor.u32 %v1605, 2147483648
        %v1615 = vsel %vm1613, %v1614, %v1606
        %v1616 = vsel %vm1609, %v1612, %v1615
        %v1617 = vsel %vm1607, nan, %v1616
        %v1618 = vand.u32 2147483647, %v1482
        %vm1619 = vcmp.le.f32.partialorder %v1618, 0.7853982
        %vm1620 = vcmp.lt.s32.totalorder %v1482, 0
        %v1621 = vand.u32 %v1482, 2139095040
        %v1622 = vshrl.u32 %v1621, 23
        %v1623 = vsub.s32 %v1622, 127
        %v1624 = vand.u32 2147483647, %v1482
        %v1625 = vand.u32 %v1624, 8388607
        %v1626 = vor.u32 %v1625, 8388608
        %v1627 = vsub.s32 0, %v1626
        %v1628 = vadd.s32 %v1623, 1
        %vm1629 = vcmp.gt.s32.totalorder %v1628, 0
        %v1630 = vsel %vm1629, %v1628, 0
        %v1631 = vshrl.u32 %v1630, 5
        %v1632 = vand.u32 %v1630, 31
        %v1633 = vsub.s32 32, %v1632
        %v1634 = vshrl.u32 683565275, %v1633
        %v1635 = vshll.u32 683565275, %v1632
        %v1636 = vshrl.u32 2475754826, %v1633
        %v1637 = vor.u32 %v1635, %v1636
        %v1638 = vshll.u32 2475754826, %v1632
        %v1639 = vshrl.u32 2131351028, %v1633
        %v1640 = vor.u32 %v1638, %v1639
        %v1641 = vshll.u32 2131351028, %v1632
        %v1642 = vshrl.u32 2102212464, %v1633
        %v1643 = vor.u32 %v1641, %v1642
        %v1644 = vshll.u32 2102212464, %v1632
        %v1645 = vshrl.u32 920167782, %v1633
        %v1646 = vor.u32 %v1644, %v1645
        %v1647 = vshll.u32 920167782, %v1632
        %v1648 = vshrl.u32 1326507024, %v1633
        %v1649 = vor.u32 %v1647, %v1648
        %vm1650 = vcmp.lt.s32.totalorder %v1631, 1
        %vm1651 = vcmp.lt.s32.totalorder %v1631, 2
        %vm1652 = vcmp.lt.s32.totalorder %v1631, 3
        %vm1653 = vcmp.lt.s32.totalorder %v1631, 4
        %v1654 = vsel %vm1650, %v1634, %v1637
        %v1655 = vsel %vm1653, %v1643, 2102212464
        %v1656 = vsel %vm1652, %v1640, %v1655
        %v1657 = vsel %vm1651, %v1654, %v1656
        %v1658 = vsel %vm1650, %v1637, %v1640
        %v1659 = vsel %vm1653, %v1646, 920167782
        %v1660 = vsel %vm1652, %v1643, %v1659
        %v1661 = vsel %vm1651, %v1658, %v1660
        %v1662 = vsel %vm1650, %v1640, %v1643
        %v1663 = vsel %vm1653, %v1649, 1326507024
        %v1664 = vsel %vm1652, %v1646, %v1663
        %v1665 = vsel %vm1651, %v1662, %v1664
        %v1666 = vshll.u32 %v1626, 8
        %v1667 = vmul.u32.u64.compose %v1666, %v1665
        %v1668 = vextract.low.u32 %v1667
        %v1669 = vextract.high.u32 %v1667
        %v1670 = vmul.u32.u64.compose %v1666, %v1661
        %v1671 = vextract.low.u32 %v1670
        %v1672 = vextract.high.u32 %v1670
        %v1673 = vmul.u32 %v1666, %v1657
        %v1674 = vadd.s32 %v1669, %v1671
        %vm1675 = vc.u32 %v1669, %v1671
        %v1676 = vadd.s32 %v1672, 1
        %v1677 = vsel %vm1675, %v1676, %v1672
        %v1678 = vadd.s32 %v1673, %v1677
        %v1679 = vadd.s32 %v1678, 536870912
        %v1680 = vshrl.u32 %v1679, 30
        %v1681 = vshll.u32 %v1680, 30
        %v1682 = vsub.s32 %v1678, %v1681
        %vm1683 = vcmp.lt.s32.totalorder %v1682, 0
        %v1684 = vsub.s32 0, %v1682
        %v1685 = vsel %vm1683, %v1684, %v1682
        %v1686 = vclz %v1685
        %v1687 = vsub.s32 %v1686, 2
        %vm1688 = vcmp.gt.s32.totalorder 0, %v1687
        %v1689 = vsel %vm1688, 0, %v1687
        %v1690 = vsub.s32 32, %v1689
        %v1691 = vshll.u32 %v1682, %v1689
        %v1692 = vshrl.u32 %v1674, %v1690
        %v1693 = vor.u32 %v1691, %v1692
        %v1694 = vsub.s32 4294967266, %v1689
        %v1695 = vadd.s32 %v1694, 127
        %v1696 = vshll.u32 %v1695, 23
        %v1697 = vor.u32 4788187, %v1696
        %v1698 = vand.u32 2147483647, %v1697
        %v1700 = vcvt.s32.f32 %v1693
        %v1701 = vmul.f32 %v1700, %v1698
        %v1702 = vxor.u32 %v1701, 2147483648
        %v1703 = vsel %vm1620, %v1702, %v1701
        %v1704 = vsub.s32 4, %v1680
        %v1705 = vsel %vm1620, %v1704, %v1680
        %v1706 = vsel %vm1619, %v1482, %v1703
        %v1707 = vsel %vm1619, 0, %v1705
        %v1708 = vcosq.f32.pop %v1706
        %v1709 = vsinq.f32.pop %v1706
        %vm1710 = vweird.f32 %v1482
        %v1711 = vand.u32 %v1707, 3
        %vm1712 = vcmp.lt.s32.totalorder %v1711, 2
        %vm1713 = vcmp.eq.s32.totalorder %v1711, 0
        %v1714 = vxor.u32 %v1709, 2147483648
        %v1715 = vsel %vm1713, %v1708, %v1714
        %vm1716 = vcmp.eq.s32.totalorder %v1711, 2
        %v1717 = vxor.u32 %v1708, 2147483648
        %v1718 = vsel %vm1716, %v1717, %v1709
        %v1719 = vsel %vm1712, %v1715, %v1718
        %v1720 = vsel %vm1710, nan, %v1719
        %v1721 = vand.u32 2147483647, %v1487
        %vm1722 = vcmp.le.f32.partialorder %v1721, 0.7853982
        %vm1723 = vcmp.lt.s32.totalorder %v1487, 0
        %v1724 = vand.u32 %v1487, 2139095040
        %v1725 = vshrl.u32 %v1724, 23
        %v1726 = vsub.s32 %v1725, 127
        %v1727 = vand.u32 2147483647, %v1487
        %v1728 = vand.u32 %v1727, 8388607
        %v1729 = vor.u32 %v1728, 8388608
        %v1730 = vsub.s32 0, %v1729
        %v1731 = vadd.s32 %v1726, 1
        %vm1732 = vcmp.gt.s32.totalorder %v1731, 0
        %v1733 = vsel %vm1732, %v1731, 0
        %v1734 = vshrl.u32 %v1733, 5
        %v1735 = vand.u32 %v1733, 31
        %v1736 = vsub.s32 32, %v1735
        %v1737 = vshrl.u32 683565275, %v1736
        %v1738 = vshll.u32 683565275, %v1735
        %v1739 = vshrl.u32 2475754826, %v1736
        %v1740 = vor.u32 %v1738, %v1739
        %v1741 = vshll.u32 2475754826, %v1735
        %v1742 = vshrl.u32 2131351028, %v1736
        %v1743 = vor.u32 %v1741, %v1742
        %v1744 = vshll.u32 2131351028, %v1735
        %v1745 = vshrl.u32 2102212464, %v1736
        %v1746 = vor.u32 %v1744, %v1745
        %v1747 = vshll.u32 2102212464, %v1735
        %v1748 = vshrl.u32 920167782, %v1736
        %v1749 = vor.u32 %v1747, %v1748
        %v1750 = vshll.u32 920167782, %v1735
        %v1751 = vshrl.u32 1326507024, %v1736
        %v1752 = vor.u32 %v1750, %v1751
        %vm1753 = vcmp.lt.s32.totalorder %v1734, 1
        %vm1754 = vcmp.lt.s32.totalorder %v1734, 2
        %vm1755 = vcmp.lt.s32.totalorder %v1734, 3
        %vm1756 = vcmp.lt.s32.totalorder %v1734, 4
        %v1757 = vsel %vm1753, %v1737, %v1740
        %v1758 = vsel %vm1756, %v1746, 2102212464
        %v1759 = vsel %vm1755, %v1743, %v1758
        %v1760 = vsel %vm1754, %v1757, %v1759
        %v1761 = vsel %vm1753, %v1740, %v1743
        %v1762 = vsel %vm1756, %v1749, 920167782
        %v1763 = vsel %vm1755, %v1746, %v1762
        %v1764 = vsel %vm1754, %v1761, %v1763
        %v1765 = vsel %vm1753, %v1743, %v1746
        %v1766 = vsel %vm1756, %v1752, 1326507024
        %v1767 = vsel %vm1755, %v1749, %v1766
        %v1768 = vsel %vm1754, %v1765, %v1767
        %v1769 = vshll.u32 %v1729, 8
        %v1770 = vmul.u32.u64.compose %v1769, %v1768
        %v1771 = vextract.low.u32 %v1770
        %v1772 = vextract.high.u32 %v1770
        %v1773 = vmul.u32.u64.compose %v1769, %v1764
        %v1774 = vextract.low.u32 %v1773
        %v1775 = vextract.high.u32 %v1773
        %v1776 = vmul.u32 %v1769, %v1760
        %v1777 = vadd.s32 %v1772, %v1774
        %vm1778 = vc.u32 %v1772, %v1774
        %v1779 = vadd.s32 %v1775, 1
        %v1780 = vsel %vm1778, %v1779, %v1775
        %v1781 = vadd.s32 %v1776, %v1780
        %v1782 = vadd.s32 %v1781, 536870912
        %v1783 = vshrl.u32 %v1782, 30
        %v1784 = vshll.u32 %v1783, 30
        %v1785 = vsub.s32 %v1781, %v1784
        %vm1786 = vcmp.lt.s32.totalorder %v1785, 0
        %v1787 = vsub.s32 0, %v1785
        %v1788 = vsel %vm1786, %v1787, %v1785
        %v1789 = vclz %v1788
        %v1790 = vsub.s32 %v1789, 2
        %vm1791 = vcmp.gt.s32.totalorder 0, %v1790
        %v1792 = vsel %vm1791, 0, %v1790
        %v1793 = vsub.s32 32, %v1792
        %v1794 = vshll.u32 %v1785, %v1792
        %v1795 = vshrl.u32 %v1777, %v1793
        %v1796 = vor.u32 %v1794, %v1795
        %v1797 = vsub.s32 4294967266, %v1792
        %v1798 = vadd.s32 %v1797, 127
        %v1799 = vshll.u32 %v1798, 23
        %v1800 = vor.u32 4788187, %v1799
        %v1801 = vand.u32 2147483647, %v1800
        %v1803 = vcvt.s32.f32 %v1796
        %v1804 = vmul.f32 %v1803, %v1801
        %v1805 = vxor.u32 %v1804, 2147483648
        %v1806 = vsel %vm1723, %v1805, %v1804
        %v1807 = vsub.s32 4, %v1783
        %v1808 = vsel %vm1723, %v1807, %v1783
        %v1809 = vsel %vm1722, %v1487, %v1806
        %v1810 = vsel %vm1722, 0, %v1808
        %v1811 = vcosq.f32.pop %v1809
        %v1812 = vsinq.f32.pop %v1809
        %vm1813 = vweird.f32 %v1487
        %v1814 = vand.u32 %v1810, 3
        %vm1815 = vcmp.lt.s32.totalorder %v1814, 2
        %vm1816 = vcmp.eq.s32.totalorder %v1814, 0
        %v1817 = vxor.u32 %v1812, 2147483648
        %v1818 = vsel %vm1816, %v1811, %v1817
        %vm1819 = vcmp.eq.s32.totalorder %v1814, 2
        %v1820 = vxor.u32 %v1811, 2147483648
        %v1821 = vsel %vm1819, %v1820, %v1812
        %v1822 = vsel %vm1815, %v1818, %v1821
        %v1823 = vsel %vm1813, nan, %v1822
        %v1824 = vand.u32 2147483647, %v1492
        %vm1825 = vcmp.le.f32.partialorder %v1824, 0.7853982
        %vm1826 = vcmp.lt.s32.totalorder %v1492, 0
        %v1827 = vand.u32 %v1492, 2139095040
        %v1828 = vshrl.u32 %v1827, 23
        %v1829 = vsub.s32 %v1828, 127
        %v1830 = vand.u32 2147483647, %v1492
        %v1831 = vand.u32 %v1830, 8388607
        %v1832 = vor.u32 %v1831, 8388608
        %v1833 = vsub.s32 0, %v1832
        %v1834 = vadd.s32 %v1829, 1
        %vm1835 = vcmp.gt.s32.totalorder %v1834, 0
        %v1836 = vsel %vm1835, %v1834, 0
        %v1837 = vshrl.u32 %v1836, 5
        %v1838 = vand.u32 %v1836, 31
        %v1839 = vsub.s32 32, %v1838
        %v1840 = vshrl.u32 683565275, %v1839
        %v1841 = vshll.u32 683565275, %v1838
        %v1842 = vshrl.u32 2475754826, %v1839
        %v1843 = vor.u32 %v1841, %v1842
        %v1844 = vshll.u32 2475754826, %v1838
        %v1845 = vshrl.u32 2131351028, %v1839
        %v1846 = vor.u32 %v1844, %v1845
        %v1847 = vshll.u32 2131351028, %v1838
        %v1848 = vshrl.u32 2102212464, %v1839
        %v1849 = vor.u32 %v1847, %v1848
        %v1850 = vshll.u32 2102212464, %v1838
        %v1851 = vshrl.u32 920167782, %v1839
        %v1852 = vor.u32 %v1850, %v1851
        %v1853 = vshll.u32 920167782, %v1838
        %v1854 = vshrl.u32 1326507024, %v1839
        %v1855 = vor.u32 %v1853, %v1854
        %vm1856 = vcmp.lt.s32.totalorder %v1837, 1
        %vm1857 = vcmp.lt.s32.totalorder %v1837, 2
        %vm1858 = vcmp.lt.s32.totalorder %v1837, 3
        %vm1859 = vcmp.lt.s32.totalorder %v1837, 4
        %v1860 = vsel %vm1856, %v1840, %v1843
        %v1861 = vsel %vm1859, %v1849, 2102212464
        %v1862 = vsel %vm1858, %v1846, %v1861
        %v1863 = vsel %vm1857, %v1860, %v1862
        %v1864 = vsel %vm1856, %v1843, %v1846
        %v1865 = vsel %vm1859, %v1852, 920167782
        %v1866 = vsel %vm1858, %v1849, %v1865
        %v1867 = vsel %vm1857, %v1864, %v1866
        %v1868 = vsel %vm1856, %v1846, %v1849
        %v1869 = vsel %vm1859, %v1855, 1326507024
        %v1870 = vsel %vm1858, %v1852, %v1869
        %v1871 = vsel %vm1857, %v1868, %v1870
        %v1872 = vshll.u32 %v1832, 8
        %v1873 = vmul.u32.u64.compose %v1872, %v1871
        %v1874 = vextract.low.u32 %v1873
        %v1875 = vextract.high.u32 %v1873
        %v1876 = vmul.u32.u64.compose %v1872, %v1867
        %v1877 = vextract.low.u32 %v1876
        %v1878 = vextract.high.u32 %v1876
        %v1879 = vmul.u32 %v1872, %v1863
        %v1880 = vadd.s32 %v1875, %v1877
        %vm1881 = vc.u32 %v1875, %v1877
        %v1882 = vadd.s32 %v1878, 1
        %v1883 = vsel %vm1881, %v1882, %v1878
        %v1884 = vadd.s32 %v1879, %v1883
        %v1885 = vadd.s32 %v1884, 536870912
        %v1886 = vshrl.u32 %v1885, 30
        %v1887 = vshll.u32 %v1886, 30
        %v1888 = vsub.s32 %v1884, %v1887
        %vm1889 = vcmp.lt.s32.totalorder %v1888, 0
        %v1890 = vsub.s32 0, %v1888
        %v1891 = vsel %vm1889, %v1890, %v1888
        %v1892 = vclz %v1891
        %v1893 = vsub.s32 %v1892, 2
        %vm1894 = vcmp.gt.s32.totalorder 0, %v1893
        %v1895 = vsel %vm1894, 0, %v1893
        %v1896 = vsub.s32 32, %v1895
        %v1897 = vshll.u32 %v1888, %v1895
        %v1898 = vshrl.u32 %v1880, %v1896
        %v1899 = vor.u32 %v1897, %v1898
        %v1900 = vsub.s32 4294967266, %v1895
        %v1901 = vadd.s32 %v1900, 127
        %v1902 = vshll.u32 %v1901, 23
        %v1903 = vor.u32 4788187, %v1902
        %v1904 = vand.u32 2147483647, %v1903
        %v1906 = vcvt.s32.f32 %v1899
        %v1907 = vmul.f32 %v1906, %v1904
        %v1908 = vxor.u32 %v1907, 2147483648
        %v1909 = vsel %vm1826, %v1908, %v1907
        %v1910 = vsub.s32 4, %v1886
        %v1911 = vsel %vm1826, %v1910, %v1886
        %v1912 = vsel %vm1825, %v1492, %v1909
        %v1913 = vsel %vm1825, 0, %v1911
        %v1914 = vcosq.f32.pop %v1912
        %v1915 = vsinq.f32.pop %v1912
        %vm1916 = vweird.f32 %v1492
        %v1917 = vand.u32 %v1913, 3
        %vm1918 = vcmp.lt.s32.totalorder %v1917, 2
        %vm1919 = vcmp.eq.s32.totalorder %v1917, 0
        %v1920 = vxor.u32 %v1915, 2147483648
        %v1921 = vsel %vm1919, %v1914, %v1920
        %vm1922 = vcmp.eq.s32.totalorder %v1917, 2
        %v1923 = vxor.u32 %v1914, 2147483648
        %v1924 = vsel %vm1922, %v1923, %v1915
        %v1925 = vsel %vm1918, %v1921, %v1924
        %v1926 = vsel %vm1916, nan, %v1925
        %v1927 = vand.u32 2147483647, %v1497
        %vm1928 = vcmp.le.f32.partialorder %v1927, 0.7853982
        %vm1929 = vcmp.lt.s32.totalorder %v1497, 0
        %v1930 = vand.u32 %v1497, 2139095040
        %v1931 = vshrl.u32 %v1930, 23
        %v1932 = vsub.s32 %v1931, 127
        %v1933 = vand.u32 2147483647, %v1497
        %v1934 = vand.u32 %v1933, 8388607
        %v1935 = vor.u32 %v1934, 8388608
        %v1936 = vsub.s32 0, %v1935
        %v1937 = vadd.s32 %v1932, 1
        %vm1938 = vcmp.gt.s32.totalorder %v1937, 0
        %v1939 = vsel %vm1938, %v1937, 0
        %v1940 = vshrl.u32 %v1939, 5
        %v1941 = vand.u32 %v1939, 31
        %v1942 = vsub.s32 32, %v1941
        %v1943 = vshrl.u32 683565275, %v1942
        %v1944 = vshll.u32 683565275, %v1941
        %v1945 = vshrl.u32 2475754826, %v1942
        %v1946 = vor.u32 %v1944, %v1945
        %v1947 = vshll.u32 2475754826, %v1941
        %v1948 = vshrl.u32 2131351028, %v1942
        %v1949 = vor.u32 %v1947, %v1948
        %v1950 = vshll.u32 2131351028, %v1941
        %v1951 = vshrl.u32 2102212464, %v1942
        %v1952 = vor.u32 %v1950, %v1951
        %v1953 = vshll.u32 2102212464, %v1941
        %v1954 = vshrl.u32 920167782, %v1942
        %v1955 = vor.u32 %v1953, %v1954
        %v1956 = vshll.u32 920167782, %v1941
        %v1957 = vshrl.u32 1326507024, %v1942
        %v1958 = vor.u32 %v1956, %v1957
        %vm1959 = vcmp.lt.s32.totalorder %v1940, 1
        %vm1960 = vcmp.lt.s32.totalorder %v1940, 2
        %vm1961 = vcmp.lt.s32.totalorder %v1940, 3
        %vm1962 = vcmp.lt.s32.totalorder %v1940, 4
        %v1963 = vsel %vm1959, %v1943, %v1946
        %v1964 = vsel %vm1962, %v1952, 2102212464
        %v1965 = vsel %vm1961, %v1949, %v1964
        %v1966 = vsel %vm1960, %v1963, %v1965
        %v1967 = vsel %vm1959, %v1946, %v1949
        %v1968 = vsel %vm1962, %v1955, 920167782
        %v1969 = vsel %vm1961, %v1952, %v1968
        %v1970 = vsel %vm1960, %v1967, %v1969
        %v1971 = vsel %vm1959, %v1949, %v1952
        %v1972 = vsel %vm1962, %v1958, 1326507024
        %v1973 = vsel %vm1961, %v1955, %v1972
        %v1974 = vsel %vm1960, %v1971, %v1973
        %v1975 = vshll.u32 %v1935, 8
        %v1976 = vmul.u32.u64.compose %v1975, %v1974
        %v1977 = vextract.low.u32 %v1976
        %v1978 = vextract.high.u32 %v1976
        %v1979 = vmul.u32.u64.compose %v1975, %v1970
        %v1980 = vextract.low.u32 %v1979
        %v1981 = vextract.high.u32 %v1979
        %v1982 = vmul.u32 %v1975, %v1966
        %v1983 = vadd.s32 %v1978, %v1980
        %vm1984 = vc.u32 %v1978, %v1980
        %v1985 = vadd.s32 %v1981, 1
        %v1986 = vsel %vm1984, %v1985, %v1981
        %v1987 = vadd.s32 %v1982, %v1986
        %v1988 = vadd.s32 %v1987, 536870912
        %v1989 = vshrl.u32 %v1988, 30
        %v1990 = vshll.u32 %v1989, 30
        %v1991 = vsub.s32 %v1987, %v1990
        %vm1992 = vcmp.lt.s32.totalorder %v1991, 0
        %v1993 = vsub.s32 0, %v1991
        %v1994 = vsel %vm1992, %v1993, %v1991
        %v1995 = vclz %v1994
        %v1996 = vsub.s32 %v1995, 2
        %vm1997 = vcmp.gt.s32.totalorder 0, %v1996
        %v1998 = vsel %vm1997, 0, %v1996
        %v1999 = vsub.s32 32, %v1998
        %v2000 = vshll.u32 %v1991, %v1998
        %v2001 = vshrl.u32 %v1983, %v1999
        %v2002 = vor.u32 %v2000, %v2001
        %v2003 = vsub.s32 4294967266, %v1998
        %v2004 = vadd.s32 %v2003, 127
        %v2005 = vshll.u32 %v2004, 23
        %v2006 = vor.u32 4788187, %v2005
        %v2007 = vand.u32 2147483647, %v2006
        %v2009 = vcvt.s32.f32 %v2002
        %v2010 = vmul.f32 %v2009, %v2007
        %v2011 = vxor.u32 %v2010, 2147483648
        %v2012 = vsel %vm1929, %v2011, %v2010
        %v2013 = vsub.s32 4, %v1989
        %v2014 = vsel %vm1929, %v2013, %v1989
        %v2015 = vsel %vm1928, %v1497, %v2012
        %v2016 = vsel %vm1928, 0, %v2014
        %v2017 = vcosq.f32.pop %v2015
        %v2018 = vsinq.f32.pop %v2015
        %vm2019 = vweird.f32 %v1497
        %v2020 = vand.u32 %v2016, 3
        %vm2021 = vcmp.lt.s32.totalorder %v2020, 2
        %vm2022 = vcmp.eq.s32.totalorder %v2020, 0
        %v2023 = vxor.u32 %v2018, 2147483648
        %v2024 = vsel %vm2022, %v2017, %v2023
        %vm2025 = vcmp.eq.s32.totalorder %v2020, 2
        %v2026 = vxor.u32 %v2017, 2147483648
        %v2027 = vsel %vm2025, %v2026, %v2018
        %v2028 = vsel %vm2021, %v2024, %v2027
        %v2029 = vsel %vm2019, nan, %v2028
        %v2030 = vand.u32 2147483647, %v1502
        %vm2031 = vcmp.le.f32.partialorder %v2030, 0.7853982
        %vm2032 = vcmp.lt.s32.totalorder %v1502, 0
        %v2033 = vand.u32 %v1502, 2139095040
        %v2034 = vshrl.u32 %v2033, 23
        %v2035 = vsub.s32 %v2034, 127
        %v2036 = vand.u32 2147483647, %v1502
        %v2037 = vand.u32 %v2036, 8388607
        %v2038 = vor.u32 %v2037, 8388608
        %v2039 = vsub.s32 0, %v2038
        %v2040 = vadd.s32 %v2035, 1
        %vm2041 = vcmp.gt.s32.totalorder %v2040, 0
        %v2042 = vsel %vm2041, %v2040, 0
        %v2043 = vshrl.u32 %v2042, 5
        %v2044 = vand.u32 %v2042, 31
        %v2045 = vsub.s32 32, %v2044
        %v2046 = vshrl.u32 683565275, %v2045
        %v2047 = vshll.u32 683565275, %v2044
        %v2048 = vshrl.u32 2475754826, %v2045
        %v2049 = vor.u32 %v2047, %v2048
        %v2050 = vshll.u32 2475754826, %v2044
        %v2051 = vshrl.u32 2131351028, %v2045
        %v2052 = vor.u32 %v2050, %v2051
        %v2053 = vshll.u32 2131351028, %v2044
        %v2054 = vshrl.u32 2102212464, %v2045
        %v2055 = vor.u32 %v2053, %v2054
        %v2056 = vshll.u32 2102212464, %v2044
        %v2057 = vshrl.u32 920167782, %v2045
        %v2058 = vor.u32 %v2056, %v2057
        %v2059 = vshll.u32 920167782, %v2044
        %v2060 = vshrl.u32 1326507024, %v2045
        %v2061 = vor.u32 %v2059, %v2060
        %vm2062 = vcmp.lt.s32.totalorder %v2043, 1
        %vm2063 = vcmp.lt.s32.totalorder %v2043, 2
        %vm2064 = vcmp.lt.s32.totalorder %v2043, 3
        %vm2065 = vcmp.lt.s32.totalorder %v2043, 4
        %v2066 = vsel %vm2062, %v2046, %v2049
        %v2067 = vsel %vm2065, %v2055, 2102212464
        %v2068 = vsel %vm2064, %v2052, %v2067
        %v2069 = vsel %vm2063, %v2066, %v2068
        %v2070 = vsel %vm2062, %v2049, %v2052
        %v2071 = vsel %vm2065, %v2058, 920167782
        %v2072 = vsel %vm2064, %v2055, %v2071
        %v2073 = vsel %vm2063, %v2070, %v2072
        %v2074 = vsel %vm2062, %v2052, %v2055
        %v2075 = vsel %vm2065, %v2061, 1326507024
        %v2076 = vsel %vm2064, %v2058, %v2075
        %v2077 = vsel %vm2063, %v2074, %v2076
        %v2078 = vshll.u32 %v2038, 8
        %v2079 = vmul.u32.u64.compose %v2078, %v2077
        %v2080 = vextract.low.u32 %v2079
        %v2081 = vextract.high.u32 %v2079
        %v2082 = vmul.u32.u64.compose %v2078, %v2073
        %v2083 = vextract.low.u32 %v2082
        %v2084 = vextract.high.u32 %v2082
        %v2085 = vmul.u32 %v2078, %v2069
        %v2086 = vadd.s32 %v2081, %v2083
        %vm2087 = vc.u32 %v2081, %v2083
        %v2088 = vadd.s32 %v2084, 1
        %v2089 = vsel %vm2087, %v2088, %v2084
        %v2090 = vadd.s32 %v2085, %v2089
        %v2091 = vadd.s32 %v2090, 536870912
        %v2092 = vshrl.u32 %v2091, 30
        %v2093 = vshll.u32 %v2092, 30
        %v2094 = vsub.s32 %v2090, %v2093
        %vm2095 = vcmp.lt.s32.totalorder %v2094, 0
        %v2096 = vsub.s32 0, %v2094
        %v2097 = vsel %vm2095, %v2096, %v2094
        %v2098 = vclz %v2097
        %v2099 = vsub.s32 %v2098, 2
        %vm2100 = vcmp.gt.s32.totalorder 0, %v2099
        %v2101 = vsel %vm2100, 0, %v2099
        %v2102 = vsub.s32 32, %v2101
        %v2103 = vshll.u32 %v2094, %v2101
        %v2104 = vshrl.u32 %v2086, %v2102
        %v2105 = vor.u32 %v2103, %v2104
        %v2106 = vsub.s32 4294967266, %v2101
        %v2107 = vadd.s32 %v2106, 127
        %v2108 = vshll.u32 %v2107, 23
        %v2109 = vor.u32 4788187, %v2108
        %v2110 = vand.u32 2147483647, %v2109
        %v2112 = vcvt.s32.f32 %v2105
        %v2113 = vmul.f32 %v2112, %v2110
        %v2114 = vxor.u32 %v2113, 2147483648
        %v2115 = vsel %vm2032, %v2114, %v2113
        %v2116 = vsub.s32 4, %v2092
        %v2117 = vsel %vm2032, %v2116, %v2092
        %v2118 = vsel %vm2031, %v1502, %v2115
        %v2119 = vsel %vm2031, 0, %v2117
        %v2120 = vcosq.f32.pop %v2118
        %v2121 = vsinq.f32.pop %v2118
        %vm2122 = vweird.f32 %v1502
        %v2123 = vand.u32 %v2119, 3
        %vm2124 = vcmp.lt.s32.totalorder %v2123, 2
        %vm2125 = vcmp.eq.s32.totalorder %v2123, 0
        %v2126 = vxor.u32 %v2121, 2147483648
        %v2127 = vsel %vm2125, %v2120, %v2126
        %vm2128 = vcmp.eq.s32.totalorder %v2123, 2
        %v2129 = vxor.u32 %v2120, 2147483648
        %v2130 = vsel %vm2128, %v2129, %v2121
        %v2131 = vsel %vm2124, %v2127, %v2130
        %v2132 = vsel %vm2122, nan, %v2131
        %v2133 = vand.u32 2147483647, %v1507
        %vm2134 = vcmp.le.f32.partialorder %v2133, 0.7853982
        %vm2135 = vcmp.lt.s32.totalorder %v1507, 0
        %v2136 = vand.u32 %v1507, 2139095040
        %v2137 = vshrl.u32 %v2136, 23
        %v2138 = vsub.s32 %v2137, 127
        %v2139 = vand.u32 2147483647, %v1507
        %v2140 = vand.u32 %v2139, 8388607
        %v2141 = vor.u32 %v2140, 8388608
        %v2142 = vsub.s32 0, %v2141
        %v2143 = vadd.s32 %v2138, 1
        %vm2144 = vcmp.gt.s32.totalorder %v2143, 0
        %v2145 = vsel %vm2144, %v2143, 0
        %v2146 = vshrl.u32 %v2145, 5
        %v2147 = vand.u32 %v2145, 31
        %v2148 = vsub.s32 32, %v2147
        %v2149 = vshrl.u32 683565275, %v2148
        %v2150 = vshll.u32 683565275, %v2147
        %v2151 = vshrl.u32 2475754826, %v2148
        %v2152 = vor.u32 %v2150, %v2151
        %v2153 = vshll.u32 2475754826, %v2147
        %v2154 = vshrl.u32 2131351028, %v2148
        %v2155 = vor.u32 %v2153, %v2154
        %v2156 = vshll.u32 2131351028, %v2147
        %v2157 = vshrl.u32 2102212464, %v2148
        %v2158 = vor.u32 %v2156, %v2157
        %v2159 = vshll.u32 2102212464, %v2147
        %v2160 = vshrl.u32 920167782, %v2148
        %v2161 = vor.u32 %v2159, %v2160
        %v2162 = vshll.u32 920167782, %v2147
        %v2163 = vshrl.u32 1326507024, %v2148
        %v2164 = vor.u32 %v2162, %v2163
        %vm2165 = vcmp.lt.s32.totalorder %v2146, 1
        %vm2166 = vcmp.lt.s32.totalorder %v2146, 2
        %vm2167 = vcmp.lt.s32.totalorder %v2146, 3
        %vm2168 = vcmp.lt.s32.totalorder %v2146, 4
        %v2169 = vsel %vm2165, %v2149, %v2152
        %v2170 = vsel %vm2168, %v2158, 2102212464
        %v2171 = vsel %vm2167, %v2155, %v2170
        %v2172 = vsel %vm2166, %v2169, %v2171
        %v2173 = vsel %vm2165, %v2152, %v2155
        %v2174 = vsel %vm2168, %v2161, 920167782
        %v2175 = vsel %vm2167, %v2158, %v2174
        %v2176 = vsel %vm2166, %v2173, %v2175
        %v2177 = vsel %vm2165, %v2155, %v2158
        %v2178 = vsel %vm2168, %v2164, 1326507024
        %v2179 = vsel %vm2167, %v2161, %v2178
        %v2180 = vsel %vm2166, %v2177, %v2179
        %v2181 = vshll.u32 %v2141, 8
        %v2182 = vmul.u32.u64.compose %v2181, %v2180
        %v2183 = vextract.low.u32 %v2182
        %v2184 = vextract.high.u32 %v2182
        %v2185 = vmul.u32.u64.compose %v2181, %v2176
        %v2186 = vextract.low.u32 %v2185
        %v2187 = vextract.high.u32 %v2185
        %v2188 = vmul.u32 %v2181, %v2172
        %v2189 = vadd.s32 %v2184, %v2186
        %vm2190 = vc.u32 %v2184, %v2186
        %v2191 = vadd.s32 %v2187, 1
        %v2192 = vsel %vm2190, %v2191, %v2187
        %v2193 = vadd.s32 %v2188, %v2192
        %v2194 = vadd.s32 %v2193, 536870912
        %v2195 = vshrl.u32 %v2194, 30
        %v2196 = vshll.u32 %v2195, 30
        %v2197 = vsub.s32 %v2193, %v2196
        %vm2198 = vcmp.lt.s32.totalorder %v2197, 0
        %v2199 = vsub.s32 0, %v2197
        %v2200 = vsel %vm2198, %v2199, %v2197
        %v2201 = vclz %v2200
        %v2202 = vsub.s32 %v2201, 2
        %vm2203 = vcmp.gt.s32.totalorder 0, %v2202
        %v2204 = vsel %vm2203, 0, %v2202
        %v2205 = vsub.s32 32, %v2204
        %v2206 = vshll.u32 %v2197, %v2204
        %v2207 = vshrl.u32 %v2189, %v2205
        %v2208 = vor.u32 %v2206, %v2207
        %v2209 = vsub.s32 4294967266, %v2204
        %v2210 = vadd.s32 %v2209, 127
        %v2211 = vshll.u32 %v2210, 23
        %v2212 = vor.u32 4788187, %v2211
        %v2213 = vand.u32 2147483647, %v2212
        %v2215 = vcvt.s32.f32 %v2208
        %v2216 = vmul.f32 %v2215, %v2213
        %v2217 = vxor.u32 %v2216, 2147483648
        %v2218 = vsel %vm2135, %v2217, %v2216
        %v2219 = vsub.s32 4, %v2195
        %v2220 = vsel %vm2135, %v2219, %v2195
        %v2221 = vsel %vm2134, %v1507, %v2218
        %v2222 = vsel %vm2134, 0, %v2220
        %v2223 = vcosq.f32.pop %v2221
        %v2224 = vsinq.f32.pop %v2221
        %vm2225 = vweird.f32 %v1507
        %v2226 = vand.u32 %v2222, 3
        %vm2227 = vcmp.lt.s32.totalorder %v2226, 2
        %vm2228 = vcmp.eq.s32.totalorder %v2226, 0
        %v2229 = vxor.u32 %v2224, 2147483648
        %v2230 = vsel %vm2228, %v2223, %v2229
        %vm2231 = vcmp.eq.s32.totalorder %v2226, 2
        %v2232 = vxor.u32 %v2223, 2147483648
        %v2233 = vsel %vm2231, %v2232, %v2224
        %v2234 = vsel %vm2227, %v2230, %v2233
        %v2235 = vsel %vm2225, nan, %v2234
        %v2236 = vand.u32 2147483647, %v1512
        %vm2237 = vcmp.le.f32.partialorder %v2236, 0.7853982
        %vm2238 = vcmp.lt.s32.totalorder %v1512, 0
        %v2239 = vand.u32 %v1512, 2139095040
        %v2240 = vshrl.u32 %v2239, 23
        %v2241 = vsub.s32 %v2240, 127
        %v2242 = vand.u32 2147483647, %v1512
        %v2243 = vand.u32 %v2242, 8388607
        %v2244 = vor.u32 %v2243, 8388608
        %v2245 = vsub.s32 0, %v2244
        %v2246 = vadd.s32 %v2241, 1
        %vm2247 = vcmp.gt.s32.totalorder %v2246, 0
        %v2248 = vsel %vm2247, %v2246, 0
        %v2249 = vshrl.u32 %v2248, 5
        %v2250 = vand.u32 %v2248, 31
        %v2251 = vsub.s32 32, %v2250
        %v2252 = vshrl.u32 683565275, %v2251
        %v2253 = vshll.u32 683565275, %v2250
        %v2254 = vshrl.u32 2475754826, %v2251
        %v2255 = vor.u32 %v2253, %v2254
        %v2256 = vshll.u32 2475754826, %v2250
        %v2257 = vshrl.u32 2131351028, %v2251
        %v2258 = vor.u32 %v2256, %v2257
        %v2259 = vshll.u32 2131351028, %v2250
        %v2260 = vshrl.u32 2102212464, %v2251
        %v2261 = vor.u32 %v2259, %v2260
        %v2262 = vshll.u32 2102212464, %v2250
        %v2263 = vshrl.u32 920167782, %v2251
        %v2264 = vor.u32 %v2262, %v2263
        %v2265 = vshll.u32 920167782, %v2250
        %v2266 = vshrl.u32 1326507024, %v2251
        %v2267 = vor.u32 %v2265, %v2266
        %vm2268 = vcmp.lt.s32.totalorder %v2249, 1
        %vm2269 = vcmp.lt.s32.totalorder %v2249, 2
        %vm2270 = vcmp.lt.s32.totalorder %v2249, 3
        %vm2271 = vcmp.lt.s32.totalorder %v2249, 4
        %v2272 = vsel %vm2268, %v2252, %v2255
        %v2273 = vsel %vm2271, %v2261, 2102212464
        %v2274 = vsel %vm2270, %v2258, %v2273
        %v2275 = vsel %vm2269, %v2272, %v2274
        %v2276 = vsel %vm2268, %v2255, %v2258
        %v2277 = vsel %vm2271, %v2264, 920167782
        %v2278 = vsel %vm2270, %v2261, %v2277
        %v2279 = vsel %vm2269, %v2276, %v2278
        %v2280 = vsel %vm2268, %v2258, %v2261
        %v2281 = vsel %vm2271, %v2267, 1326507024
        %v2282 = vsel %vm2270, %v2264, %v2281
        %v2283 = vsel %vm2269, %v2280, %v2282
        %v2284 = vshll.u32 %v2244, 8
        %v2285 = vmul.u32.u64.compose %v2284, %v2283
        %v2286 = vextract.low.u32 %v2285
        %v2287 = vextract.high.u32 %v2285
        %v2288 = vmul.u32.u64.compose %v2284, %v2279
        %v2289 = vextract.low.u32 %v2288
        %v2290 = vextract.high.u32 %v2288
        %v2291 = vmul.u32 %v2284, %v2275
        %v2292 = vadd.s32 %v2287, %v2289
        %vm2293 = vc.u32 %v2287, %v2289
        %v2294 = vadd.s32 %v2290, 1
        %v2295 = vsel %vm2293, %v2294, %v2290
        %v2296 = vadd.s32 %v2291, %v2295
        %v2297 = vadd.s32 %v2296, 536870912
        %v2298 = vshrl.u32 %v2297, 30
        %v2299 = vshll.u32 %v2298, 30
        %v2300 = vsub.s32 %v2296, %v2299
        %vm2301 = vcmp.lt.s32.totalorder %v2300, 0
        %v2302 = vsub.s32 0, %v2300
        %v2303 = vsel %vm2301, %v2302, %v2300
        %v2304 = vclz %v2303
        %v2305 = vsub.s32 %v2304, 2
        %vm2306 = vcmp.gt.s32.totalorder 0, %v2305
        %v2307 = vsel %vm2306, 0, %v2305
        %v2308 = vsub.s32 32, %v2307
        %v2309 = vshll.u32 %v2300, %v2307
        %v2310 = vshrl.u32 %v2292, %v2308
        %v2311 = vor.u32 %v2309, %v2310
        %v2312 = vsub.s32 4294967266, %v2307
        %v2313 = vadd.s32 %v2312, 127
        %v2314 = vshll.u32 %v2313, 23
        %v2315 = vor.u32 4788187, %v2314
        %v2316 = vand.u32 2147483647, %v2315
        %v2318 = vcvt.s32.f32 %v2311
        %v2319 = vmul.f32 %v2318, %v2316
        %v2320 = vxor.u32 %v2319, 2147483648
        %v2321 = vsel %vm2238, %v2320, %v2319
        %v2322 = vsub.s32 4, %v2298
        %v2323 = vsel %vm2238, %v2322, %v2298
        %v2324 = vsel %vm2237, %v1512, %v2321
        %v2325 = vsel %vm2237, 0, %v2323
        %v2326 = vcosq.f32.pop %v2324
        %v2327 = vsinq.f32.pop %v2324
        %vm2328 = vweird.f32 %v1512
        %v2329 = vand.u32 %v2325, 3
        %vm2330 = vcmp.lt.s32.totalorder %v2329, 2
        %vm2331 = vcmp.eq.s32.totalorder %v2329, 0
        %v2332 = vxor.u32 %v2327, 2147483648
        %v2333 = vsel %vm2331, %v2326, %v2332
        %vm2334 = vcmp.eq.s32.totalorder %v2329, 2
        %v2335 = vxor.u32 %v2326, 2147483648
        %v2336 = vsel %vm2334, %v2335, %v2327
        %v2337 = vsel %vm2330, %v2333, %v2336
        %v2338 = vsel %vm2328, nan, %v2337
        %v2339 = vld [vmem:[%s403] sm:$0x1]
        %v2341 = vlaneseq
        %v2342 = vshrl.u32 %v2341, 7
        %v2343 = vsub.s32 0, %v2342
        %v2344 = vrot.slane %v2339, %v2343
        %v2346 = vmul.f32 %v1617, %v2344
        %v2347 = vmul.f32 %v1720, %v2344
        %v2348 = vmul.f32 %v1823, %v2344
        %v2349 = vmul.f32 %v1926, %v2344
        %v2350 = vmul.f32 %v2029, %v2344
        %v2351 = vmul.f32 %v2132, %v2344
        %v2352 = vmul.f32 %v2235, %v2344
        %v2353 = vmul.f32 %v2338, %v2344
        %2354 = vadd.xlane.f32.xlu0 %v2346
        %v2355 = vpop.xlane.xlu0 %2354
        %2356 = vadd.xlane.f32.xlu0 %v2347
        %v2357 = vpop.xlane.xlu0 %2356
        %2358 = vadd.xlane.f32.xlu0 %v2348
        %v2359 = vpop.xlane.xlu0 %2358
        %2360 = vadd.xlane.f32.xlu0 %v2349
        %v2361 = vpop.xlane.xlu0 %2360
        %2362 = vadd.xlane.f32.xlu0 %v2350
        %v2363 = vpop.xlane.xlu0 %2362
        %2364 = vadd.xlane.f32.xlu0 %v2351
        %v2365 = vpop.xlane.xlu0 %2364
        %2366 = vadd.xlane.f32.xlu0 %v2352
        %v2367 = vpop.xlane.xlu0 %2366
        %2368 = vadd.xlane.f32.xlu0 %v2353
        %v2369 = vpop.xlane.xlu0 %2368
        %v2370 = vld [vmem:[%s406] sm:$0x1]
        %v2372 = vlaneseq
        %v2373 = vshrl.u32 %v2372, 7
        %v2374 = vsub.s32 0, %v2373
        %v2375 = vrot.slane %v2370, %v2374
        %v2377 = vadd.f32 %v2355, %v2375
        %v2378 = vadd.f32 %v2357, %v2375
        %v2379 = vadd.f32 %v2359, %v2375
        %v2380 = vadd.f32 %v2361, %v2375
        %v2381 = vadd.f32 %v2363, %v2375
        %v2382 = vadd.f32 %v2365, %v2375
        %v2383 = vadd.f32 %v2367, %v2375
        %v2384 = vadd.f32 %v2369, %v2375
        %vm2385 = vcmask 7168
        %2386 = vst.msk [vmem:[%s415] sm:$0xff] %vm2385, %v2377
        %2387 = vst.msk [vmem:[%s415 + $0x8] sm:$0xff] %vm2385, %v2378
        %2388 = vst.msk [vmem:[%s415 + $0x10] sm:$0xff] %vm2385, %v2379
        %2389 = vst.msk [vmem:[%s415 + $0x18] sm:$0xff] %vm2385, %v2380
        %2390 = vst.msk [vmem:[%s415 + $0x20] sm:$0xff] %vm2385, %v2381
        %2391 = vst.msk [vmem:[%s415 + $0x28] sm:$0xff] %vm2385, %v2382
        %2392 = vst.msk [vmem:[%s415 + $0x30] sm:$0xff] %vm2385, %v2383
        %2393 = vst.msk [vmem:[%s415 + $0x38] sm:$0xff] %vm2385, %v2384
        %s2394 = smul.u32 8, %s26
        %p2395 = scmp.lt.s32.totalorder %s25, 7
        %s2396 = scalar_select %p2395, %s25, 7
        %p2397 = scmp.lt.s32.totalorder %s2394, 7
        %s2398 = scalar_select %p2397, %s2394, 7
        %s2399 = smul.addr %s2396, 8
        %s2400 = sadd.s32 %s2398, %s2399
        %s2401 = smul.addr %s2400, 8
        %s2402 = scalar_lea.vmem %s7, %s2401
        // Predicated region
        $region53: #{tpu_custom_call.1} parent=47 // pred_check
          %p2403 = pneg %p235
        $region54: #{tpu_custom_call.1} parent=47 // pred_check_branch
          %2405 = sbr.rel (%p2403) target = $region56
        $region55: #{tpu_custom_call.1} parent=47 // pred_region
          %s2406 = smul.u32 8, %s26
        $region56: #{tpu_custom_call.1} parent=47 // pred_fallthru
          _
      $region48: #{tpu_custom_call.1} parent=5 // pred_fallthru
        _
      %p2407 = scmp.le.s32.totalorder 2, %s16
      // Predicated region
      $region57: #{tpu_custom_call.1} parent=5 // pred_check
        %p2408 = pneg %p2407
      $region58: #{tpu_custom_call.1} parent=5 // pred_check_branch
        %2410 = sbr.rel (%p2408) target = $region60
      $region59: #{tpu_custom_call.1} parent=5 // pred_region
        %s2411 = ssub.s32 %s16, 2
        // Predicated region
        $region61: #{tpu_custom_call.1} parent=59 // pred_check
          %p2412 = pneg %p241
        $region62: #{tpu_custom_call.1} parent=59 // pred_check_branch
          %2414 = sbr.rel (%p2412) target = $region64
        $region63: #{tpu_custom_call.1} parent=59 // pred_region
          %s2415 = smul.u32 8, %s28
          %p2416 = scmp.lt.s32.totalorder %s27, 7
          %s2417 = scalar_select %p2416, %s27, 7
          %p2418 = scmp.lt.s32.totalorder %s2415, 7
          %s2419 = scalar_select %p2418, %s2415, 7
          %s2420 = smul.addr %s2417, 8
          %s2421 = sadd.s32 %s2419, %s2420
          %s2422 = smul.addr %s2421, 8
          %s2423 = scalar_lea.vmem %s7, %s2422
        $region64: #{tpu_custom_call.1} parent=59 // pred_fallthru
          _
      $region60: #{tpu_custom_call.1} parent=5 // pred_fallthru
        _
    $region6: #{tpu_custom_call.1} parent=1 // loop_footer
      %s20 = sadd.s32 1, %s16
    $region7: #{tpu_custom_call.1} parent=1 // loop_footer_branch
      %15 = sbr.rel target = $region3
    $region8: #{tpu_custom_call.1} parent=1 // loop_exit
      _
    %2424 = vsyncpa [#allocation3], 1
    %s2425 = scalar_lea.sflag [#allocation3], 1
    %2426 = vsyncpa %s2425, 1

</llo_original>
